<compile_context>
chip_gen: v5e
topology: v5e:2x2
jax: 0.10.0
libtpu: 0.0.40
codegen_flags: <defaults>
</compile_context>

<pallas_src>
import jax
import jax.numpy as jnp
import numpy as np
from jax.experimental import pallas as pl
from jax.experimental.pallas import tpu as pltpu


# --------------------------------------------------------------------------
# In-kernel helper: (n, n//2) matrix with 0.5 at [2q, q] and [2q+1, q].
# Right-multiplying by it averages adjacent column pairs (W half of AvgPool2d(2)).
# Generated from iota in registers -> no HBM constant, no DMA.
# --------------------------------------------------------------------------
def _half_pool_matrix(n):
    r = jax.lax.broadcasted_iota(jnp.int32, (n, n // 2), 0)
    c = jax.lax.broadcasted_iota(jnp.int32, (n, n // 2), 1)
    hit = (r == 2 * c) | (r == 2 * c + 1)
    return jnp.where(hit, 0.5, 0.0).astype(jnp.float32)


# --------------------------------------------------------------------------
# The fused per-image kernel (grid = (batch,)).
# Activation layout inside the kernel: 2-D (C * H, W), rows = c*H + h.
# --------------------------------------------------------------------------
def _lenet5_kernel(x_ref, w1_ref, b1_ref, w2_ref, b2_ref,
                   wf1_ref, bf1_ref, wf2_ref, bf2_ref, wf3_ref, bf3_ref,
                   o_ref):
    f32 = jnp.float32
    x = x_ref[0]                                       # (32, 32) padded image

    # conv1 (5x5, pad=2, bias) + 2x2 avg-pool (H half folded into the banded
    # weights): 5 matmuls, one per kernel column, then the W-pool matmul.
    acc1 = jnp.dot(w1_ref[0], x[:, 0:28], preferred_element_type=f32)
    for kw in range(1, 5):
        acc1 = acc1 + jnp.dot(w1_ref[kw], x[:, kw:kw + 28],
                              preferred_element_type=f32)       # (84, 28)
    a1 = jnp.dot(acc1, _half_pool_matrix(28), preferred_element_type=f32)
    a1 = jnp.maximum(a1 + b1_ref[...], 0.0)            # (84, 14) = (6*14, 14)

    # conv2 (5x5, no pad, bias) + pool, same trick on the (6*14, 14) layout.
    acc2 = jnp.dot(w2_ref[0], a1[:, 0:10], preferred_element_type=f32)
    for kw in range(1, 5):
        acc2 = acc2 + jnp.dot(w2_ref[kw], a1[:, kw:kw + 10],
                              preferred_element_type=f32)       # (80, 10)
    a2 = jnp.dot(acc2, _half_pool_matrix(10), preferred_element_type=f32)
    a2 = jnp.maximum(a2 + b2_ref[...], 0.0)            # (80, 5) = (16*5, 5)

    # fc1: PyTorch flatten order (c*25 + h*5 + w) is folded into 5
    # column-sliced matvecs against pre-split weights (no in-kernel reshape).
    h = bf1_ref[...]                                   # (120, 1)
    for w in range(5):
        h = h + jnp.dot(wf1_ref[w], a2[:, w:w + 1], preferred_element_type=f32)
    # fc2, fc3 in column-vector form use the native PyTorch (out, in) layout.
    h = jnp.dot(wf2_ref[...], h, preferred_element_type=f32) + bf2_ref[...]   # (84, 1)
    h = jnp.dot(wf3_ref[...], h, preferred_element_type=f32) + bf3_ref[...]   # (10, 1)

    o_ref[0] = h                                       # logits column for this image


# --------------------------------------------------------------------------
# Parameters: PyTorch-layout init + one-time host-side repack for the kernel.
# --------------------------------------------------------------------------
def init_params(key):
    ks = jax.random.split(key, 10)

    def u(k, shape, fan_in):
        bound = 1.0 / float(fan_in) ** 0.5
        return jax.random.uniform(k, shape, jnp.float32, -bound, bound)

    return dict(
        conv1_w=u(ks[0], (6, 1, 5, 5), 25),    conv1_b=u(ks[1], (6,), 25),
        conv2_w=u(ks[2], (16, 6, 5, 5), 150),  conv2_b=u(ks[3], (16,), 150),
        lin1_w=u(ks[4], (120, 400), 400),      lin1_b=u(ks[5], (120,), 400),
        lin2_w=u(ks[6], (84, 120), 120),       lin2_b=u(ks[7], (84,), 120),
        lin3_w=u(ks[8], (10, 84), 84),         lin3_b=u(ks[9], (10,), 84),
    )


def _conv_pool_toeplitz(w, h_in):
    """Repack conv weights (Cout, Cin, 5, 5) into (5, Cout*Hout/2, Cin*h_in)
    banded matrices so that, on the (Cin*h_in, W) activation layout,
    sum_kw mat[kw] @ act[:, kw:kw+W_out] equals the convolution with the H half
    of the 2x2 average pool already applied (bias added later, which commutes
    with average pooling)."""
    w = np.asarray(w, np.float32)
    cout, cin, K, _ = w.shape
    h_out = h_in - K + 1
    hp = h_out // 2
    i = np.arange(h_out)[:, None]            # conv output row
    r = np.arange(h_in)[None, :]             # input row
    kh = r - i
    valid = ((kh >= 0) & (kh < K)).astype(np.float32)
    khc = np.clip(kh, 0, K - 1)
    mats = []
    for kw in range(K):
        t = w[:, :, khc, kw] * valid[None, None]                 # (Cout, Cin, h_out, h_in)
        t = t.reshape(cout, cin, hp, 2, h_in).sum(axis=3) * 0.5  # fold row pooling
        t = t.transpose(0, 2, 1, 3).reshape(cout * hp, cin * h_in)
        mats.append(t)
    return jnp.asarray(np.stack(mats), jnp.float32)


def prepare_params(params):
    """One-time, host-side repack into the layouts the fused kernel consumes
    (removes all per-call weight transposes / im2col glue)."""
    p = {k: np.asarray(v, np.float32) for k, v in params.items()}
    return dict(
        w1=_conv_pool_toeplitz(p["conv1_w"], 32),                      # (5, 84, 32)
        b1=jnp.asarray(np.repeat(p["conv1_b"], 14)[:, None]),          # (84, 1)
        w2=_conv_pool_toeplitz(p["conv2_w"], 14),                      # (5, 80, 84)
        b2=jnp.asarray(np.repeat(p["conv2_b"], 5)[:, None]),           # (80, 1)
        # wf1[w][n, c*5+h] = lin1_w[n, c*25 + h*5 + w]  (flatten folded in)
        wf1=jnp.asarray(p["lin1_w"].reshape(120, 80, 5).transpose(2, 0, 1)),
        bf1=jnp.asarray(p["lin1_b"][:, None]),                         # (120, 1)
        wf2=jnp.asarray(p["lin2_w"]),                                  # (84, 120)
        bf2=jnp.asarray(p["lin2_b"][:, None]),                         # (84, 1)
        wf3=jnp.asarray(p["lin3_w"]),                                  # (10, 84)
        bf3=jnp.asarray(p["lin3_b"][:, None]),                         # (10, 1)
    )


# --------------------------------------------------------------------------
# Forward pass: one fused pallas_call over a batch-parallel grid.
# --------------------------------------------------------------------------
def lenet5_forward(prep, x):
    """x: (B, 1, 28, 28) f32 NCHW -> (B, 10) logits."""
    B = x.shape[0]
    # conv1's padding=2 applied once to the network input (only XLA op before
    # the fused kernel; everything downstream stays in VMEM).
    xp = jnp.pad(x.astype(jnp.float32).reshape(B, 28, 28),
                 ((0, 0), (2, 2), (2, 2)))                             # (B, 32, 32)
    out = pl.pallas_call(
        _lenet5_kernel,
        out_shape=jax.ShapeDtypeStruct((B, 10, 1), jnp.float32),
        grid=(B,),
        in_specs=[
            pl.BlockSpec((1, 32, 32), lambda i: (i, 0, 0)),   # one image per step
            pl.BlockSpec((5, 84, 32), lambda i: (0, 0, 0)),   # weights: VMEM-resident
            pl.BlockSpec((84, 1), lambda i: (0, 0)),
            pl.BlockSpec((5, 80, 84), lambda i: (0, 0, 0)),
            pl.BlockSpec((80, 1), lambda i: (0, 0)),
            pl.BlockSpec((5, 120, 80), lambda i: (0, 0, 0)),
            pl.BlockSpec((120, 1), lambda i: (0, 0)),
            pl.BlockSpec((84, 120), lambda i: (0, 0)),
            pl.BlockSpec((84, 1), lambda i: (0, 0)),
            pl.BlockSpec((10, 84), lambda i: (0, 0)),
            pl.BlockSpec((10, 1), lambda i: (0, 0)),
        ],
        out_specs=pl.BlockSpec((1, 10, 1), lambda i: (i, 0, 0)),
        compiler_params=pltpu.CompilerParams(
            dimension_semantics=("parallel",)),  # batch splits across TCs on v7x
    )(xp, prep["w1"], prep["b1"], prep["w2"], prep["b2"],
      prep["wf1"], prep["bf1"], prep["wf2"], prep["bf2"],
      prep["wf3"], prep["bf3"])
    return out.reshape(B, 10)


# --------------------------------------------------------------------------
# Pure-JAX reference (matches the PyTorch forward) for a correctness check.
# --------------------------------------------------------------------------
def _avgpool2_ref(x):
    B, C, H, W = x.shape
    return x.reshape(B, C, H // 2, 2, W // 2, 2).mean(axis=(3, 5))


def lenet5_reference(params, x):
    dn = ("NCHW", "OIHW", "NCHW")
    y = jax.lax.conv_general_dilated(x, params["conv1_w"], (1, 1),
                                     ((2, 2), (2, 2)), dimension_numbers=dn)
    y = y + params["conv1_b"][None, :, None, None]
    y = jnp.maximum(_avgpool2_ref(y), 0.0)
    y = jax.lax.conv_general_dilated(y, params["conv2_w"], (1, 1),
                                     ((0, 0), (0, 0)), dimension_numbers=dn)
    y = y + params["conv2_b"][None, :, None, None]
    y = jnp.maximum(_avgpool2_ref(y), 0.0)
    y = y.reshape(y.shape[0], -1)
    y = y @ params["lin1_w"].T + params["lin1_b"]
    y = y @ params["lin2_w"].T + params["lin2_b"]
    y = y @ params["lin3_w"].T + params["lin3_b"]
    return y


if __name__ == "__main__":
    key = jax.random.PRNGKey(0)
    pkey, xkey = jax.random.split(key)
    params = init_params(pkey)
    prep = prepare_params(params)          # one-time host-side weight repack

    # linear1.in_features == 400  =>  1x28x28 inputs.
    x = jax.random.normal(xkey, (2, 1, 28, 28), jnp.float32)

    out = jax.jit(lenet5_forward)(prep, x)
    out = jax.block_until_ready(out)
    assert out.shape == (2, 10) and out.dtype == jnp.float32

    ref = lenet5_reference(params, x)
    assert jnp.allclose(out, ref, atol=5e-2, rtol=5e-2), (
        f"max abs err {jnp.max(jnp.abs(out - ref)):.3e}")

    print("KERNEL_OK")
</pallas_src>

<mosaic_0001>
module attributes {stable_mosaic.version = 11 : i64} {
  func.func @_lenet5_kernel(%arg0: i32, %arg1: memref<1x32x32xf32, #tpu.memory_space<vmem>>, %arg2: memref<5x84x32xf32, #tpu.memory_space<vmem>>, %arg3: memref<84x1xf32, #tpu.memory_space<vmem>>, %arg4: memref<5x80x84xf32, #tpu.memory_space<vmem>>, %arg5: memref<80x1xf32, #tpu.memory_space<vmem>>, %arg6: memref<5x120x80xf32, #tpu.memory_space<vmem>>, %arg7: memref<120x1xf32, #tpu.memory_space<vmem>>, %arg8: memref<84x120xf32, #tpu.memory_space<vmem>>, %arg9: memref<84x1xf32, #tpu.memory_space<vmem>>, %arg10: memref<10x84xf32, #tpu.memory_space<vmem>>, %arg11: memref<10x1xf32, #tpu.memory_space<vmem>>, %arg12: memref<1x10x1xf32, #tpu.memory_space<vmem>>) attributes {dimension_semantics = [#tpu.dimension_semantics<parallel>], iteration_bounds = array<i64: 2>, scalar_prefetch = 0 : i64, scratch_operands = 0 : i64, tpu.core_type = #tpu.core_type<tc>, window_params = [{transform_indices = @transform_0, window_bounds = array<i64: 1, 32, 32>}, {pipeline_mode = #tpu.pipeline_mode<synchronous>, transform_indices = @transform_1, window_bounds = array<i64: 5, 84, 32>}, {pipeline_mode = #tpu.pipeline_mode<synchronous>, transform_indices = @transform_2, window_bounds = array<i64: 84, 1>}, {pipeline_mode = #tpu.pipeline_mode<synchronous>, transform_indices = @transform_3, window_bounds = array<i64: 5, 80, 84>}, {pipeline_mode = #tpu.pipeline_mode<synchronous>, transform_indices = @transform_4, window_bounds = array<i64: 80, 1>}, {pipeline_mode = #tpu.pipeline_mode<synchronous>, transform_indices = @transform_5, window_bounds = array<i64: 5, 120, 80>}, {pipeline_mode = #tpu.pipeline_mode<synchronous>, transform_indices = @transform_6, window_bounds = array<i64: 120, 1>}, {pipeline_mode = #tpu.pipeline_mode<synchronous>, transform_indices = @transform_7, window_bounds = array<i64: 84, 120>}, {pipeline_mode = #tpu.pipeline_mode<synchronous>, transform_indices = @transform_8, window_bounds = array<i64: 84, 1>}, {pipeline_mode = #tpu.pipeline_mode<synchronous>, transform_indices = @transform_9, window_bounds = array<i64: 10, 84>}, {pipeline_mode = #tpu.pipeline_mode<synchronous>, transform_indices = @transform_10, window_bounds = array<i64: 10, 1>}, {transform_indices = @transform_11, window_bounds = array<i64: 1, 10, 1>}]} {
    %c0 = arith.constant 0 : index
    %c0_0 = arith.constant 0 : index
    %c0_1 = arith.constant 0 : index
    %0 = vector.load %arg1[%c0, %c0_0, %c0_1] : memref<1x32x32xf32, #tpu.memory_space<vmem>>, vector<1x32x32xf32>
    %1 = vector.shape_cast %0 : vector<1x32x32xf32> to vector<32x32xf32>
    %c0_2 = arith.constant 0 : index
    %c0_3 = arith.constant 0 : index
    %c0_4 = arith.constant 0 : index
    %2 = vector.load %arg2[%c0_2, %c0_3, %c0_4] : memref<5x84x32xf32, #tpu.memory_space<vmem>>, vector<1x84x32xf32>
    %3 = vector.shape_cast %2 : vector<1x84x32xf32> to vector<84x32xf32>
    %4 = vector.extract_strided_slice %1 {offsets = [0, 0], sizes = [32, 28], strides = [1, 1]} : vector<32x32xf32> to vector<32x28xf32>
    %cst = arith.constant dense<0.000000e+00> : vector<84x28xf32>
    %5 = tpu.matmul %3, %4, %cst {dimension_numbers = #tpu.dot_dimension_numbers<[1], [0], [0], [1], [0, 0, 1, 1], [], []>} : vector<84x32xf32>, vector<32x28xf32>, vector<84x28xf32> -> vector<84x28xf32>
    %c1 = arith.constant 1 : index
    %c0_5 = arith.constant 0 : index
    %c0_6 = arith.constant 0 : index
    %6 = vector.load %arg2[%c1, %c0_5, %c0_6] : memref<5x84x32xf32, #tpu.memory_space<vmem>>, vector<1x84x32xf32>
    %7 = vector.shape_cast %6 : vector<1x84x32xf32> to vector<84x32xf32>
    %8 = vector.extract_strided_slice %1 {offsets = [0, 1], sizes = [32, 28], strides = [1, 1]} : vector<32x32xf32> to vector<32x28xf32>
    %cst_7 = arith.constant dense<0.000000e+00> : vector<84x28xf32>
    %9 = tpu.matmul %7, %8, %cst_7 {dimension_numbers = #tpu.dot_dimension_numbers<[1], [0], [0], [1], [0, 0, 1, 1], [], []>} : vector<84x32xf32>, vector<32x28xf32>, vector<84x28xf32> -> vector<84x28xf32>
    %10 = arith.addf %5, %9 : vector<84x28xf32>
    %c2 = arith.constant 2 : index
    %c0_8 = arith.constant 0 : index
    %c0_9 = arith.constant 0 : index
    %11 = vector.load %arg2[%c2, %c0_8, %c0_9] : memref<5x84x32xf32, #tpu.memory_space<vmem>>, vector<1x84x32xf32>
    %12 = vector.shape_cast %11 : vector<1x84x32xf32> to vector<84x32xf32>
    %13 = vector.extract_strided_slice %1 {offsets = [0, 2], sizes = [32, 28], strides = [1, 1]} : vector<32x32xf32> to vector<32x28xf32>
    %cst_10 = arith.constant dense<0.000000e+00> : vector<84x28xf32>
    %14 = tpu.matmul %12, %13, %cst_10 {dimension_numbers = #tpu.dot_dimension_numbers<[1], [0], [0], [1], [0, 0, 1, 1], [], []>} : vector<84x32xf32>, vector<32x28xf32>, vector<84x28xf32> -> vector<84x28xf32>
    %15 = arith.addf %10, %14 : vector<84x28xf32>
    %c3 = arith.constant 3 : index
    %c0_11 = arith.constant 0 : index
    %c0_12 = arith.constant 0 : index
    %16 = vector.load %arg2[%c3, %c0_11, %c0_12] : memref<5x84x32xf32, #tpu.memory_space<vmem>>, vector<1x84x32xf32>
    %17 = vector.shape_cast %16 : vector<1x84x32xf32> to vector<84x32xf32>
    %18 = vector.extract_strided_slice %1 {offsets = [0, 3], sizes = [32, 28], strides = [1, 1]} : vector<32x32xf32> to vector<32x28xf32>
    %cst_13 = arith.constant dense<0.000000e+00> : vector<84x28xf32>
    %19 = tpu.matmul %17, %18, %cst_13 {dimension_numbers = #tpu.dot_dimension_numbers<[1], [0], [0], [1], [0, 0, 1, 1], [], []>} : vector<84x32xf32>, vector<32x28xf32>, vector<84x28xf32> -> vector<84x28xf32>
    %20 = arith.addf %15, %19 : vector<84x28xf32>
    %c4 = arith.constant 4 : index
    %c0_14 = arith.constant 0 : index
    %c0_15 = arith.constant 0 : index
    %21 = vector.load %arg2[%c4, %c0_14, %c0_15] : memref<5x84x32xf32, #tpu.memory_space<vmem>>, vector<1x84x32xf32>
    %22 = vector.shape_cast %21 : vector<1x84x32xf32> to vector<84x32xf32>
    %23 = vector.extract_strided_slice %1 {offsets = [0, 4], sizes = [32, 28], strides = [1, 1]} : vector<32x32xf32> to vector<32x28xf32>
    %cst_16 = arith.constant dense<0.000000e+00> : vector<84x28xf32>
    %24 = tpu.matmul %22, %23, %cst_16 {dimension_numbers = #tpu.dot_dimension_numbers<[1], [0], [0], [1], [0, 0, 1, 1], [], []>} : vector<84x32xf32>, vector<32x28xf32>, vector<84x28xf32> -> vector<84x28xf32>
    %25 = arith.addf %20, %24 : vector<84x28xf32>
    %26 = tpu.iota {dimensions = array<i32: 0>} : vector<28x14xi32>
    %27 = tpu.iota {dimensions = array<i32: 1>} : vector<28x14xi32>
    %c2_i32 = arith.constant 2 : i32
    %28 = vector.broadcast %c2_i32 : i32 to vector<28x14xi32>
    %29 = arith.muli %28, %27 : vector<28x14xi32>
    %30 = arith.cmpi eq, %26, %29 : vector<28x14xi32>
    %c2_i32_17 = arith.constant 2 : i32
    %31 = vector.broadcast %c2_i32_17 : i32 to vector<28x14xi32>
    %32 = arith.muli %31, %27 : vector<28x14xi32>
    %c1_i32 = arith.constant 1 : i32
    %33 = vector.broadcast %c1_i32 : i32 to vector<28x14xi32>
    %34 = arith.addi %32, %33 : vector<28x14xi32>
    %35 = arith.cmpi eq, %26, %34 : vector<28x14xi32>
    %36 = arith.ori %30, %35 : vector<28x14xi1>
    %cst_18 = arith.constant 5.000000e-01 : f32
    %cst_19 = arith.constant 0.000000e+00 : f32
    %37 = vector.broadcast %cst_18 : f32 to vector<28x14xf32>
    %38 = vector.broadcast %cst_19 : f32 to vector<28x14xf32>
    %39 = arith.select %36, %37, %38 : vector<28x14xi1>, vector<28x14xf32>
    %cst_20 = arith.constant dense<0.000000e+00> : vector<84x14xf32>
    %40 = tpu.matmul %25, %39, %cst_20 {dimension_numbers = #tpu.dot_dimension_numbers<[1], [0], [0], [1], [0, 0, 1, 1], [], []>} : vector<84x28xf32>, vector<28x14xf32>, vector<84x14xf32> -> vector<84x14xf32>
    %c0_21 = arith.constant 0 : index
    %c0_22 = arith.constant 0 : index
    %41 = vector.load %arg3[%c0_21, %c0_22] : memref<84x1xf32, #tpu.memory_space<vmem>>, vector<84x1xf32>
    %42 = vector.broadcast %41 : vector<84x1xf32> to vector<84x14xf32>
    %43 = arith.addf %40, %42 : vector<84x14xf32>
    %cst_23 = arith.constant 0.000000e+00 : f32
    %44 = vector.broadcast %cst_23 : f32 to vector<84x14xf32>
    %45 = arith.maximumf %43, %44 : vector<84x14xf32>
    %c0_24 = arith.constant 0 : index
    %c0_25 = arith.constant 0 : index
    %c0_26 = arith.constant 0 : index
    %46 = vector.load %arg4[%c0_24, %c0_25, %c0_26] : memref<5x80x84xf32, #tpu.memory_space<vmem>>, vector<1x80x84xf32>
    %47 = vector.shape_cast %46 : vector<1x80x84xf32> to vector<80x84xf32>
    %48 = vector.extract_strided_slice %45 {offsets = [0, 0], sizes = [84, 10], strides = [1, 1]} : vector<84x14xf32> to vector<84x10xf32>
    %cst_27 = arith.constant dense<0.000000e+00> : vector<80x10xf32>
    %49 = tpu.matmul %47, %48, %cst_27 {dimension_numbers = #tpu.dot_dimension_numbers<[1], [0], [0], [1], [0, 0, 1, 1], [], []>} : vector<80x84xf32>, vector<84x10xf32>, vector<80x10xf32> -> vector<80x10xf32>
    %c1_28 = arith.constant 1 : index
    %c0_29 = arith.constant 0 : index
    %c0_30 = arith.constant 0 : index
    %50 = vector.load %arg4[%c1_28, %c0_29, %c0_30] : memref<5x80x84xf32, #tpu.memory_space<vmem>>, vector<1x80x84xf32>
    %51 = vector.shape_cast %50 : vector<1x80x84xf32> to vector<80x84xf32>
    %52 = vector.extract_strided_slice %45 {offsets = [0, 1], sizes = [84, 10], strides = [1, 1]} : vector<84x14xf32> to vector<84x10xf32>
    %cst_31 = arith.constant dense<0.000000e+00> : vector<80x10xf32>
    %53 = tpu.matmul %51, %52, %cst_31 {dimension_numbers = #tpu.dot_dimension_numbers<[1], [0], [0], [1], [0, 0, 1, 1], [], []>} : vector<80x84xf32>, vector<84x10xf32>, vector<80x10xf32> -> vector<80x10xf32>
    %54 = arith.addf %49, %53 : vector<80x10xf32>
    %c2_32 = arith.constant 2 : index
    %c0_33 = arith.constant 0 : index
    %c0_34 = arith.constant 0 : index
    %55 = vector.load %arg4[%c2_32, %c0_33, %c0_34] : memref<5x80x84xf32, #tpu.memory_space<vmem>>, vector<1x80x84xf32>
    %56 = vector.shape_cast %55 : vector<1x80x84xf32> to vector<80x84xf32>
    %57 = vector.extract_strided_slice %45 {offsets = [0, 2], sizes = [84, 10], strides = [1, 1]} : vector<84x14xf32> to vector<84x10xf32>
    %cst_35 = arith.constant dense<0.000000e+00> : vector<80x10xf32>
    %58 = tpu.matmul %56, %57, %cst_35 {dimension_numbers = #tpu.dot_dimension_numbers<[1], [0], [0], [1], [0, 0, 1, 1], [], []>} : vector<80x84xf32>, vector<84x10xf32>, vector<80x10xf32> -> vector<80x10xf32>
    %59 = arith.addf %54, %58 : vector<80x10xf32>
    %c3_36 = arith.constant 3 : index
    %c0_37 = arith.constant 0 : index
    %c0_38 = arith.constant 0 : index
    %60 = vector.load %arg4[%c3_36, %c0_37, %c0_38] : memref<5x80x84xf32, #tpu.memory_space<vmem>>, vector<1x80x84xf32>
    %61 = vector.shape_cast %60 : vector<1x80x84xf32> to vector<80x84xf32>
    %62 = vector.extract_strided_slice %45 {offsets = [0, 3], sizes = [84, 10], strides = [1, 1]} : vector<84x14xf32> to vector<84x10xf32>
    %cst_39 = arith.constant dense<0.000000e+00> : vector<80x10xf32>
    %63 = tpu.matmul %61, %62, %cst_39 {dimension_numbers = #tpu.dot_dimension_numbers<[1], [0], [0], [1], [0, 0, 1, 1], [], []>} : vector<80x84xf32>, vector<84x10xf32>, vector<80x10xf32> -> vector<80x10xf32>
    %64 = arith.addf %59, %63 : vector<80x10xf32>
    %c4_40 = arith.constant 4 : index
    %c0_41 = arith.constant 0 : index
    %c0_42 = arith.constant 0 : index
    %65 = vector.load %arg4[%c4_40, %c0_41, %c0_42] : memref<5x80x84xf32, #tpu.memory_space<vmem>>, vector<1x80x84xf32>
    %66 = vector.shape_cast %65 : vector<1x80x84xf32> to vector<80x84xf32>
    %67 = vector.extract_strided_slice %45 {offsets = [0, 4], sizes = [84, 10], strides = [1, 1]} : vector<84x14xf32> to vector<84x10xf32>
    %cst_43 = arith.constant dense<0.000000e+00> : vector<80x10xf32>
    %68 = tpu.matmul %66, %67, %cst_43 {dimension_numbers = #tpu.dot_dimension_numbers<[1], [0], [0], [1], [0, 0, 1, 1], [], []>} : vector<80x84xf32>, vector<84x10xf32>, vector<80x10xf32> -> vector<80x10xf32>
    %69 = arith.addf %64, %68 : vector<80x10xf32>
    %70 = tpu.iota {dimensions = array<i32: 0>} : vector<10x5xi32>
    %71 = tpu.iota {dimensions = array<i32: 1>} : vector<10x5xi32>
    %c2_i32_44 = arith.constant 2 : i32
    %72 = vector.broadcast %c2_i32_44 : i32 to vector<10x5xi32>
    %73 = arith.muli %72, %71 : vector<10x5xi32>
    %74 = arith.cmpi eq, %70, %73 : vector<10x5xi32>
    %c2_i32_45 = arith.constant 2 : i32
    %75 = vector.broadcast %c2_i32_45 : i32 to vector<10x5xi32>
    %76 = arith.muli %75, %71 : vector<10x5xi32>
    %c1_i32_46 = arith.constant 1 : i32
    %77 = vector.broadcast %c1_i32_46 : i32 to vector<10x5xi32>
    %78 = arith.addi %76, %77 : vector<10x5xi32>
    %79 = arith.cmpi eq, %70, %78 : vector<10x5xi32>
    %80 = arith.ori %74, %79 : vector<10x5xi1>
    %cst_47 = arith.constant 5.000000e-01 : f32
    %cst_48 = arith.constant 0.000000e+00 : f32
    %81 = vector.broadcast %cst_47 : f32 to vector<10x5xf32>
    %82 = vector.broadcast %cst_48 : f32 to vector<10x5xf32>
    %83 = arith.select %80, %81, %82 : vector<10x5xi1>, vector<10x5xf32>
    %cst_49 = arith.constant dense<0.000000e+00> : vector<80x5xf32>
    %84 = tpu.matmul %69, %83, %cst_49 {dimension_numbers = #tpu.dot_dimension_numbers<[1], [0], [0], [1], [0, 0, 1, 1], [], []>} : vector<80x10xf32>, vector<10x5xf32>, vector<80x5xf32> -> vector<80x5xf32>
    %c0_50 = arith.constant 0 : index
    %c0_51 = arith.constant 0 : index
    %85 = vector.load %arg5[%c0_50, %c0_51] : memref<80x1xf32, #tpu.memory_space<vmem>>, vector<80x1xf32>
    %86 = vector.broadcast %85 : vector<80x1xf32> to vector<80x5xf32>
    %87 = arith.addf %84, %86 : vector<80x5xf32>
    %cst_52 = arith.constant 0.000000e+00 : f32
    %88 = vector.broadcast %cst_52 : f32 to vector<80x5xf32>
    %89 = arith.maximumf %87, %88 : vector<80x5xf32>
    %c0_53 = arith.constant 0 : index
    %c0_54 = arith.constant 0 : index
    %90 = vector.load %arg7[%c0_53, %c0_54] : memref<120x1xf32, #tpu.memory_space<vmem>>, vector<120x1xf32>
    %c0_55 = arith.constant 0 : index
    %c0_56 = arith.constant 0 : index
    %c0_57 = arith.constant 0 : index
    %91 = vector.load %arg6[%c0_55, %c0_56, %c0_57] : memref<5x120x80xf32, #tpu.memory_space<vmem>>, vector<1x120x80xf32>
    %92 = vector.shape_cast %91 : vector<1x120x80xf32> to vector<120x80xf32>
    %93 = vector.extract_strided_slice %89 {offsets = [0, 0], sizes = [80, 1], strides = [1, 1]} : vector<80x5xf32> to vector<80x1xf32>
    %cst_58 = arith.constant dense<0.000000e+00> : vector<120x1xf32>
    %94 = tpu.matmul %92, %93, %cst_58 {dimension_numbers = #tpu.dot_dimension_numbers<[1], [0], [0], [1], [0, 0, 1, 1], [], []>} : vector<120x80xf32>, vector<80x1xf32>, vector<120x1xf32> -> vector<120x1xf32>
    %95 = arith.addf %90, %94 : vector<120x1xf32>
    %c1_59 = arith.constant 1 : index
    %c0_60 = arith.constant 0 : index
    %c0_61 = arith.constant 0 : index
    %96 = vector.load %arg6[%c1_59, %c0_60, %c0_61] : memref<5x120x80xf32, #tpu.memory_space<vmem>>, vector<1x120x80xf32>
    %97 = vector.shape_cast %96 : vector<1x120x80xf32> to vector<120x80xf32>
    %98 = vector.extract_strided_slice %89 {offsets = [0, 1], sizes = [80, 1], strides = [1, 1]} : vector<80x5xf32> to vector<80x1xf32>
    %cst_62 = arith.constant dense<0.000000e+00> : vector<120x1xf32>
    %99 = tpu.matmul %97, %98, %cst_62 {dimension_numbers = #tpu.dot_dimension_numbers<[1], [0], [0], [1], [0, 0, 1, 1], [], []>} : vector<120x80xf32>, vector<80x1xf32>, vector<120x1xf32> -> vector<120x1xf32>
    %100 = arith.addf %95, %99 : vector<120x1xf32>
    %c2_63 = arith.constant 2 : index
    %c0_64 = arith.constant 0 : index
    %c0_65 = arith.constant 0 : index
    %101 = vector.load %arg6[%c2_63, %c0_64, %c0_65] : memref<5x120x80xf32, #tpu.memory_space<vmem>>, vector<1x120x80xf32>
    %102 = vector.shape_cast %101 : vector<1x120x80xf32> to vector<120x80xf32>
    %103 = vector.extract_strided_slice %89 {offsets = [0, 2], sizes = [80, 1], strides = [1, 1]} : vector<80x5xf32> to vector<80x1xf32>
    %cst_66 = arith.constant dense<0.000000e+00> : vector<120x1xf32>
    %104 = tpu.matmul %102, %103, %cst_66 {dimension_numbers = #tpu.dot_dimension_numbers<[1], [0], [0], [1], [0, 0, 1, 1], [], []>} : vector<120x80xf32>, vector<80x1xf32>, vector<120x1xf32> -> vector<120x1xf32>
    %105 = arith.addf %100, %104 : vector<120x1xf32>
    %c3_67 = arith.constant 3 : index
    %c0_68 = arith.constant 0 : index
    %c0_69 = arith.constant 0 : index
    %106 = vector.load %arg6[%c3_67, %c0_68, %c0_69] : memref<5x120x80xf32, #tpu.memory_space<vmem>>, vector<1x120x80xf32>
    %107 = vector.shape_cast %106 : vector<1x120x80xf32> to vector<120x80xf32>
    %108 = vector.extract_strided_slice %89 {offsets = [0, 3], sizes = [80, 1], strides = [1, 1]} : vector<80x5xf32> to vector<80x1xf32>
    %cst_70 = arith.constant dense<0.000000e+00> : vector<120x1xf32>
    %109 = tpu.matmul %107, %108, %cst_70 {dimension_numbers = #tpu.dot_dimension_numbers<[1], [0], [0], [1], [0, 0, 1, 1], [], []>} : vector<120x80xf32>, vector<80x1xf32>, vector<120x1xf32> -> vector<120x1xf32>
    %110 = arith.addf %105, %109 : vector<120x1xf32>
    %c4_71 = arith.constant 4 : index
    %c0_72 = arith.constant 0 : index
    %c0_73 = arith.constant 0 : index
    %111 = vector.load %arg6[%c4_71, %c0_72, %c0_73] : memref<5x120x80xf32, #tpu.memory_space<vmem>>, vector<1x120x80xf32>
    %112 = vector.shape_cast %111 : vector<1x120x80xf32> to vector<120x80xf32>
    %113 = vector.extract_strided_slice %89 {offsets = [0, 4], sizes = [80, 1], strides = [1, 1]} : vector<80x5xf32> to vector<80x1xf32>
    %cst_74 = arith.constant dense<0.000000e+00> : vector<120x1xf32>
    %114 = tpu.matmul %112, %113, %cst_74 {dimension_numbers = #tpu.dot_dimension_numbers<[1], [0], [0], [1], [0, 0, 1, 1], [], []>} : vector<120x80xf32>, vector<80x1xf32>, vector<120x1xf32> -> vector<120x1xf32>
    %115 = arith.addf %110, %114 : vector<120x1xf32>
    %c0_75 = arith.constant 0 : index
    %c0_76 = arith.constant 0 : index
    %116 = vector.load %arg8[%c0_75, %c0_76] : memref<84x120xf32, #tpu.memory_space<vmem>>, vector<84x120xf32>
    %cst_77 = arith.constant dense<0.000000e+00> : vector<84x1xf32>
    %117 = tpu.matmul %116, %115, %cst_77 {dimension_numbers = #tpu.dot_dimension_numbers<[1], [0], [0], [1], [0, 0, 1, 1], [], []>} : vector<84x120xf32>, vector<120x1xf32>, vector<84x1xf32> -> vector<84x1xf32>
    %c0_78 = arith.constant 0 : index
    %c0_79 = arith.constant 0 : index
    %118 = vector.load %arg9[%c0_78, %c0_79] : memref<84x1xf32, #tpu.memory_space<vmem>>, vector<84x1xf32>
    %119 = arith.addf %117, %118 : vector<84x1xf32>
    %c0_80 = arith.constant 0 : index
    %c0_81 = arith.constant 0 : index
    %120 = vector.load %arg10[%c0_80, %c0_81] : memref<10x84xf32, #tpu.memory_space<vmem>>, vector<10x84xf32>
    %cst_82 = arith.constant dense<0.000000e+00> : vector<10x1xf32>
    %121 = tpu.matmul %120, %119, %cst_82 {dimension_numbers = #tpu.dot_dimension_numbers<[1], [0], [0], [1], [0, 0, 1, 1], [], []>} : vector<10x84xf32>, vector<84x1xf32>, vector<10x1xf32> -> vector<10x1xf32>
    %c0_83 = arith.constant 0 : index
    %c0_84 = arith.constant 0 : index
    %122 = vector.load %arg11[%c0_83, %c0_84] : memref<10x1xf32, #tpu.memory_space<vmem>>, vector<10x1xf32>
    %123 = arith.addf %121, %122 : vector<10x1xf32>
    %c0_85 = arith.constant 0 : index
    %c0_86 = arith.constant 0 : index
    %c0_87 = arith.constant 0 : index
    %124 = vector.load %arg12[%c0_85, %c0_86, %c0_87] : memref<1x10x1xf32, #tpu.memory_space<vmem>>, vector<1x10x1xf32>
    %125 = vector.shape_cast %124 : vector<1x10x1xf32> to vector<10x1xf32>
    %126 = vector.shape_cast %123 : vector<10x1xf32> to vector<1x10x1xf32>
    tpu.vector_store %arg12[%c0_85, %c0_86, %c0_87], %126 {strides = array<i32>} : memref<1x10x1xf32, #tpu.memory_space<vmem>>, vector<1x10x1xf32>,
    return
  }
  func.func @transform_0(%arg0: i32) -> (i32, i32, i32) {
    %c0_i32 = arith.constant 0 : i32
    %c0_i32_0 = arith.constant 0 : i32
    %c0_i32_1 = arith.constant 0 : i32
    return %arg0, %c0_i32, %c0_i32_0 : i32, i32, i32
  }
  func.func @transform_1(%arg0: i32) -> (i32, i32, i32) {
    %c0_i32 = arith.constant 0 : i32
    %c0_i32_0 = arith.constant 0 : i32
    %c0_i32_1 = arith.constant 0 : i32
    %c0_i32_2 = arith.constant 0 : i32
    return %c0_i32, %c0_i32_0, %c0_i32_1 : i32, i32, i32
  }
  func.func @transform_2(%arg0: i32) -> (i32, i32) {
    %c0_i32 = arith.constant 0 : i32
    %c0_i32_0 = arith.constant 0 : i32
    %c0_i32_1 = arith.constant 0 : i32
    return %c0_i32, %c0_i32_0 : i32, i32
  }
  func.func @transform_3(%arg0: i32) -> (i32, i32, i32) {
    %c0_i32 = arith.constant 0 : i32
    %c0_i32_0 = arith.constant 0 : i32
    %c0_i32_1 = arith.constant 0 : i32
    %c0_i32_2 = arith.constant 0 : i32
    return %c0_i32, %c0_i32_0, %c0_i32_1 : i32, i32, i32
  }
  func.func @transform_4(%arg0: i32) -> (i32, i32) {
    %c0_i32 = arith.constant 0 : i32
    %c0_i32_0 = arith.constant 0 : i32
    %c0_i32_1 = arith.constant 0 : i32
    return %c0_i32, %c0_i32_0 : i32, i32
  }
  func.func @transform_5(%arg0: i32) -> (i32, i32, i32) {
    %c0_i32 = arith.constant 0 : i32
    %c0_i32_0 = arith.constant 0 : i32
    %c0_i32_1 = arith.constant 0 : i32
    %c0_i32_2 = arith.constant 0 : i32
    return %c0_i32, %c0_i32_0, %c0_i32_1 : i32, i32, i32
  }
  func.func @transform_6(%arg0: i32) -> (i32, i32) {
    %c0_i32 = arith.constant 0 : i32
    %c0_i32_0 = arith.constant 0 : i32
    %c0_i32_1 = arith.constant 0 : i32
    return %c0_i32, %c0_i32_0 : i32, i32
  }
  func.func @transform_7(%arg0: i32) -> (i32, i32) {
    %c0_i32 = arith.constant 0 : i32
    %c0_i32_0 = arith.constant 0 : i32
    %c0_i32_1 = arith.constant 0 : i32
    return %c0_i32, %c0_i32_0 : i32, i32
  }
  func.func @transform_8(%arg0: i32) -> (i32, i32) {
    %c0_i32 = arith.constant 0 : i32
    %c0_i32_0 = arith.constant 0 : i32
    %c0_i32_1 = arith.constant 0 : i32
    return %c0_i32, %c0_i32_0 : i32, i32
  }
  func.func @transform_9(%arg0: i32) -> (i32, i32) {
    %c0_i32 = arith.constant 0 : i32
    %c0_i32_0 = arith.constant 0 : i32
    %c0_i32_1 = arith.constant 0 : i32
    return %c0_i32, %c0_i32_0 : i32, i32
  }
  func.func @transform_10(%arg0: i32) -> (i32, i32) {
    %c0_i32 = arith.constant 0 : i32
    %c0_i32_0 = arith.constant 0 : i32
    %c0_i32_1 = arith.constant 0 : i32
    return %c0_i32, %c0_i32_0 : i32, i32
  }
  func.func @transform_11(%arg0: i32) -> (i32, i32, i32) {
    %c0_i32 = arith.constant 0 : i32
    %c0_i32_0 = arith.constant 0 : i32
    %c0_i32_1 = arith.constant 0 : i32
    return %arg0, %c0_i32, %c0_i32_0 : i32, i32, i32
  }
}

</mosaic_0001>

<llo_original>
// kernel: lenet5_forward.1
$region0: #{lenet5_forward.1}
  #allocation0 [shape = 'u32[]', space=smem, size = 0x4, offset = 0x4, fixed_abs, tag = 'smem constant byte address 0x4 - core index']
  #allocation1 [shape = 'u32[72,128]{1,0:T(1,128)}', space=vmem, size = 0x9000, scoped, tag = 'internal scratch']
  %s0 = inlined_call_operand.vmem [shape: f32[2,32,32], index: 0, kind: input, shape index: {}]
  %s1 = inlined_call_operand.vmem [shape: f32[5,84,32], index: 1, kind: input, shape index: {}]
  %s2 = inlined_call_operand.vmem [shape: f32[84,1], index: 2, kind: input, shape index: {}]
  %s3 = inlined_call_operand.vmem [shape: f32[5,80,84], index: 3, kind: input, shape index: {}]
  %s4 = inlined_call_operand.vmem [shape: f32[80,1], index: 4, kind: input, shape index: {}]
  %s5 = inlined_call_operand.vmem [shape: f32[5,120,80], index: 5, kind: input, shape index: {}]
  %s6 = inlined_call_operand.vmem [shape: f32[120,1], index: 6, kind: input, shape index: {}]
  %s7 = inlined_call_operand.vmem [shape: f32[84,120], index: 7, kind: input, shape index: {}]
  %s8 = inlined_call_operand.vmem [shape: f32[84,1], index: 8, kind: input, shape index: {}]
  %s9 = inlined_call_operand.vmem [shape: f32[10,84], index: 9, kind: input, shape index: {}]
  %s10 = inlined_call_operand.vmem [shape: f32[10,1], index: 10, kind: input, shape index: {}]
  %s11 = inlined_call_operand.vmem [shape: f32[2,10,1], index: 11, kind: output, shape index: {}]
  %s12 = sld [smem:[#allocation0]]
  $region77: #{lenet5_forward.1} parent=0
    _
  %s14 = ssub.s32 1, %s12
  %s15 = scalar_select 0, %s14, %s12
  loop: start=0, step=1, limit=4
  $region2: #{lenet5_forward.1} parent=0 // loop_pre_header
    _
  $region3: #{lenet5_forward.1} parent=0 // loop_header
    %s17 = sphi 0, %s21
    %p18 = scmp.ge.s32.totalorder %s17, 4
    %s27 = sphi 0, %s29
    %s30 = sphi 0, %s27
    %s31 = sphi 0, %s30
    %s47 = sphi 0, %s31
    %s51 = sphi 0, %s51
    %s53 = sphi 0, %s51
    %s54 = sphi 0, %s53
    %s68 = sphi 0, %s54
    %s72 = sphi 0, %s72
    %s74 = sphi 0, %s72
    %s75 = sphi 0, %s74
    %s89 = sphi 0, %s75
    %s93 = sphi 0, %s93
    %s95 = sphi 0, %s93
    %s96 = sphi 0, %s95
    %s110 = sphi 0, %s96
    %s114 = sphi 0, %s114
    %s116 = sphi 0, %s114
    %s117 = sphi 0, %s116
    %s131 = sphi 0, %s117
    %s135 = sphi 0, %s135
    %s137 = sphi 0, %s135
    %s138 = sphi 0, %s137
    %s152 = sphi 0, %s138
    %s156 = sphi 0, %s156
    %s158 = sphi 0, %s156
    %s159 = sphi 0, %s158
    %s173 = sphi 0, %s159
    %s177 = sphi 0, %s177
    %s179 = sphi 0, %s177
    %s180 = sphi 0, %s179
    %s194 = sphi 0, %s180
    %s198 = sphi 0, %s198
    %s200 = sphi 0, %s198
    %s201 = sphi 0, %s200
    %s215 = sphi 0, %s201
    %s219 = sphi 0, %s219
    %s221 = sphi 0, %s219
    %s222 = sphi 0, %s221
    %s236 = sphi 0, %s222
    %s240 = sphi 0, %s240
    %s242 = sphi 0, %s240
    %s243 = sphi 0, %s242
    %s257 = sphi 0, %s243
    %s263 = sphi 0, %s265
    %s266 = sphi 0, %s263
    %s267 = sphi 0, %s266
    %s283 = sphi 0, %s267
  $region4: #{lenet5_forward.1} parent=0 // loop_header_branch
    %20 = sbr.rel (%p18) target = $region8
  $region5: #{lenet5_forward.1} parent=0 // loop_body
    %s22 = ssub.s32 %s17, 1
    %s23 = ssub.s32 %s17, 2
    %s24 = sadd.s32 %s17, 1
    %s25 = ssub.s32 %s17, %s24
    %p26 = scmp.eq.s32.totalorder %s25, 0
    %s28 = sadd.s32 %s27, 1
    %s29 = scalar_select %p26, %s27, %s28
    %p32 = pneg %p26
    %p33 = scmp.eq.s32.totalorder %s17, 1
    %p34 = por %p32, %p33
    %p35 = scmp.ne.s32.totalorder %s27, %s30
    %p36 = scmp.eq.s32.totalorder %s17, 0
    %p37 = por %p35, %p36
    %p38 = scmp.ne.s32.totalorder %s27, %s30
    %p39 = scmp.eq.s32.totalorder %s22, 1
    %p40 = por %p38, %p39
    %p41 = scmp.ne.s32.totalorder %s30, %s31
    %p42 = scmp.eq.s32.totalorder %s22, 0
    %p43 = por %p41, %p42
    %p44 = scmp.ne.s32.totalorder %s30, %s31
    %p45 = scmp.eq.s32.totalorder %s23, 1
    %p46 = por %p44, %p45
    %p48 = scmp.ne.s32.totalorder %s31, %s47
    %p49 = scmp.eq.s32.totalorder %s23, 0
    %p50 = por %p48, %p49
    %s52 = sadd.s32 %s51, 1
    %p55 = scmp.eq.s32.totalorder %s17, 1
    %p56 = scmp.ne.s32.totalorder %s51, %s53
    %p57 = scmp.eq.s32.totalorder %s17, 0
    %p58 = por %p56, %p57
    %p59 = scmp.ne.s32.totalorder %s51, %s53
    %p60 = scmp.eq.s32.totalorder %s22, 1
    %p61 = por %p59, %p60
    %p62 = scmp.ne.s32.totalorder %s53, %s54
    %p63 = scmp.eq.s32.totalorder %s22, 0
    %p64 = por %p62, %p63
    %p65 = scmp.ne.s32.totalorder %s53, %s54
    %p66 = scmp.eq.s32.totalorder %s23, 1
    %p67 = por %p65, %p66
    %p69 = scmp.ne.s32.totalorder %s54, %s68
    %p70 = scmp.eq.s32.totalorder %s23, 0
    %p71 = por %p69, %p70
    %s73 = sadd.s32 %s72, 1
    %p76 = scmp.eq.s32.totalorder %s17, 1
    %p77 = scmp.ne.s32.totalorder %s72, %s74
    %p78 = scmp.eq.s32.totalorder %s17, 0
    %p79 = por %p77, %p78
    %p80 = scmp.ne.s32.totalorder %s72, %s74
    %p81 = scmp.eq.s32.totalorder %s22, 1
    %p82 = por %p80, %p81
    %p83 = scmp.ne.s32.totalorder %s74, %s75
    %p84 = scmp.eq.s32.totalorder %s22, 0
    %p85 = por %p83, %p84
    %p86 = scmp.ne.s32.totalorder %s74, %s75
    %p87 = scmp.eq.s32.totalorder %s23, 1
    %p88 = por %p86, %p87
    %p90 = scmp.ne.s32.totalorder %s75, %s89
    %p91 = scmp.eq.s32.totalorder %s23, 0
    %p92 = por %p90, %p91
    %s94 = sadd.s32 %s93, 1
    %p97 = scmp.eq.s32.totalorder %s17, 1
    %p98 = scmp.ne.s32.totalorder %s93, %s95
    %p99 = scmp.eq.s32.totalorder %s17, 0
    %p100 = por %p98, %p99
    %p101 = scmp.ne.s32.totalorder %s93, %s95
    %p102 = scmp.eq.s32.totalorder %s22, 1
    %p103 = por %p101, %p102
    %p104 = scmp.ne.s32.totalorder %s95, %s96
    %p105 = scmp.eq.s32.totalorder %s22, 0
    %p106 = por %p104, %p105
    %p107 = scmp.ne.s32.totalorder %s95, %s96
    %p108 = scmp.eq.s32.totalorder %s23, 1
    %p109 = por %p107, %p108
    %p111 = scmp.ne.s32.totalorder %s96, %s110
    %p112 = scmp.eq.s32.totalorder %s23, 0
    %p113 = por %p111, %p112
    %s115 = sadd.s32 %s114, 1
    %p118 = scmp.eq.s32.totalorder %s17, 1
    %p119 = scmp.ne.s32.totalorder %s114, %s116
    %p120 = scmp.eq.s32.totalorder %s17, 0
    %p121 = por %p119, %p120
    %p122 = scmp.ne.s32.totalorder %s114, %s116
    %p123 = scmp.eq.s32.totalorder %s22, 1
    %p124 = por %p122, %p123
    %p125 = scmp.ne.s32.totalorder %s116, %s117
    %p126 = scmp.eq.s32.totalorder %s22, 0
    %p127 = por %p125, %p126
    %p128 = scmp.ne.s32.totalorder %s116, %s117
    %p129 = scmp.eq.s32.totalorder %s23, 1
    %p130 = por %p128, %p129
    %p132 = scmp.ne.s32.totalorder %s117, %s131
    %p133 = scmp.eq.s32.totalorder %s23, 0
    %p134 = por %p132, %p133
    %s136 = sadd.s32 %s135, 1
    %p139 = scmp.eq.s32.totalorder %s17, 1
    %p140 = scmp.ne.s32.totalorder %s135, %s137
    %p141 = scmp.eq.s32.totalorder %s17, 0
    %p142 = por %p140, %p141
    %p143 = scmp.ne.s32.totalorder %s135, %s137
    %p144 = scmp.eq.s32.totalorder %s22, 1
    %p145 = por %p143, %p144
    %p146 = scmp.ne.s32.totalorder %s137, %s138
    %p147 = scmp.eq.s32.totalorder %s22, 0
    %p148 = por %p146, %p147
    %p149 = scmp.ne.s32.totalorder %s137, %s138
    %p150 = scmp.eq.s32.totalorder %s23, 1
    %p151 = por %p149, %p150
    %p153 = scmp.ne.s32.totalorder %s138, %s152
    %p154 = scmp.eq.s32.totalorder %s23, 0
    %p155 = por %p153, %p154
    %s157 = sadd.s32 %s156, 1
    %p160 = scmp.eq.s32.totalorder %s17, 1
    %p161 = scmp.ne.s32.totalorder %s156, %s158
    %p162 = scmp.eq.s32.totalorder %s17, 0
    %p163 = por %p161, %p162
    %p164 = scmp.ne.s32.totalorder %s156, %s158
    %p165 = scmp.eq.s32.totalorder %s22, 1
    %p166 = por %p164, %p165
    %p167 = scmp.ne.s32.totalorder %s158, %s159
    %p168 = scmp.eq.s32.totalorder %s22, 0
    %p169 = por %p167, %p168
    %p170 = scmp.ne.s32.totalorder %s158, %s159
    %p171 = scmp.eq.s32.totalorder %s23, 1
    %p172 = por %p170, %p171
    %p174 = scmp.ne.s32.totalorder %s159, %s173
    %p175 = scmp.eq.s32.totalorder %s23, 0
    %p176 = por %p174, %p175
    %s178 = sadd.s32 %s177, 1
    %p181 = scmp.eq.s32.totalorder %s17, 1
    %p182 = scmp.ne.s32.totalorder %s177, %s179
    %p183 = scmp.eq.s32.totalorder %s17, 0
    %p184 = por %p182, %p183
    %p185 = scmp.ne.s32.totalorder %s177, %s179
    %p186 = scmp.eq.s32.totalorder %s22, 1
    %p187 = por %p185, %p186
    %p188 = scmp.ne.s32.totalorder %s179, %s180
    %p189 = scmp.eq.s32.totalorder %s22, 0
    %p190 = por %p188, %p189
    %p191 = scmp.ne.s32.totalorder %s179, %s180
    %p192 = scmp.eq.s32.totalorder %s23, 1
    %p193 = por %p191, %p192
    %p195 = scmp.ne.s32.totalorder %s180, %s194
    %p196 = scmp.eq.s32.totalorder %s23, 0
    %p197 = por %p195, %p196
    %s199 = sadd.s32 %s198, 1
    %p202 = scmp.eq.s32.totalorder %s17, 1
    %p203 = scmp.ne.s32.totalorder %s198, %s200
    %p204 = scmp.eq.s32.totalorder %s17, 0
    %p205 = por %p203, %p204
    %p206 = scmp.ne.s32.totalorder %s198, %s200
    %p207 = scmp.eq.s32.totalorder %s22, 1
    %p208 = por %p206, %p207
    %p209 = scmp.ne.s32.totalorder %s200, %s201
    %p210 = scmp.eq.s32.totalorder %s22, 0
    %p211 = por %p209, %p210
    %p212 = scmp.ne.s32.totalorder %s200, %s201
    %p213 = scmp.eq.s32.totalorder %s23, 1
    %p214 = por %p212, %p213
    %p216 = scmp.ne.s32.totalorder %s201, %s215
    %p217 = scmp.eq.s32.totalorder %s23, 0
    %p218 = por %p216, %p217
    %s220 = sadd.s32 %s219, 1
    %p223 = scmp.eq.s32.totalorder %s17, 1
    %p224 = scmp.ne.s32.totalorder %s219, %s221
    %p225 = scmp.eq.s32.totalorder %s17, 0
    %p226 = por %p224, %p225
    %p227 = scmp.ne.s32.totalorder %s219, %s221
    %p228 = scmp.eq.s32.totalorder %s22, 1
    %p229 = por %p227, %p228
    %p230 = scmp.ne.s32.totalorder %s221, %s222
    %p231 = scmp.eq.s32.totalorder %s22, 0
    %p232 = por %p230, %p231
    %p233 = scmp.ne.s32.totalorder %s221, %s222
    %p234 = scmp.eq.s32.totalorder %s23, 1
    %p235 = por %p233, %p234
    %p237 = scmp.ne.s32.totalorder %s222, %s236
    %p238 = scmp.eq.s32.totalorder %s23, 0
    %p239 = por %p237, %p238
    %s241 = sadd.s32 %s240, 1
    %p244 = scmp.eq.s32.totalorder %s17, 1
    %p245 = scmp.ne.s32.totalorder %s240, %s242
    %p246 = scmp.eq.s32.totalorder %s17, 0
    %p247 = por %p245, %p246
    %p248 = scmp.ne.s32.totalorder %s240, %s242
    %p249 = scmp.eq.s32.totalorder %s22, 1
    %p250 = por %p248, %p249
    %p251 = scmp.ne.s32.totalorder %s242, %s243
    %p252 = scmp.eq.s32.totalorder %s22, 0
    %p253 = por %p251, %p252
    %p254 = scmp.ne.s32.totalorder %s242, %s243
    %p255 = scmp.eq.s32.totalorder %s23, 1
    %p256 = por %p254, %p255
    %p258 = scmp.ne.s32.totalorder %s243, %s257
    %p259 = scmp.eq.s32.totalorder %s23, 0
    %p260 = por %p258, %p259
    %s261 = ssub.s32 %s17, %s24
    %p262 = scmp.eq.s32.totalorder %s261, 0
    %s264 = sadd.s32 %s263, 1
    %s265 = scalar_select %p262, %s263, %s264
    %p268 = pneg %p262
    %p269 = scmp.eq.s32.totalorder %s17, 1
    %p270 = por %p268, %p269
    %p271 = scmp.ne.s32.totalorder %s263, %s266
    %p272 = scmp.eq.s32.totalorder %s17, 0
    %p273 = por %p271, %p272
    %p274 = scmp.ne.s32.totalorder %s263, %s266
    %p275 = scmp.eq.s32.totalorder %s22, 1
    %p276 = por %p274, %p275
    %p277 = scmp.ne.s32.totalorder %s266, %s267
    %p278 = scmp.eq.s32.totalorder %s22, 0
    %p279 = por %p277, %p278
    %p280 = scmp.ne.s32.totalorder %s266, %s267
    %p281 = scmp.eq.s32.totalorder %s23, 1
    %p282 = por %p280, %p281
    %p284 = scmp.ne.s32.totalorder %s267, %s283
    %p285 = scmp.eq.s32.totalorder %s23, 0
    %p286 = por %p284, %p285
    %p287 = scmp.le.s32.totalorder 1, %s17
    %p288 = scmp.lt.s32.totalorder %s17, 3
    %p289 = pnand %p287, %p288
    %p290 = pneg %p289
    // Predicated region
    $region9: #{lenet5_forward.1} parent=5 // pred_check
      _
    $region10: #{lenet5_forward.1} parent=5 // pred_check_branch
      %292 = sbr.rel (%p289) target = $region12
    $region11: #{lenet5_forward.1} parent=5 // pred_region
      %s293 = ssub.s32 %s17, 1
      // Predicated region
      $region13: #{lenet5_forward.1} parent=11 // pred_check
        %p294 = pneg %p64
      $region14: #{lenet5_forward.1} parent=11 // pred_check_branch
        %296 = sbr.rel (%p294) target = $region16
      $region15: #{lenet5_forward.1} parent=11 // pred_region
        _
      $region16: #{lenet5_forward.1} parent=11 // pred_fallthru
        _
      // Predicated region
      $region17: #{lenet5_forward.1} parent=11 // pred_check
        %p297 = pneg %p85
      $region18: #{lenet5_forward.1} parent=11 // pred_check_branch
        %299 = sbr.rel (%p297) target = $region20
      $region19: #{lenet5_forward.1} parent=11 // pred_region
        _
      $region20: #{lenet5_forward.1} parent=11 // pred_fallthru
        _
      // Predicated region
      $region21: #{lenet5_forward.1} parent=11 // pred_check
        %p300 = pneg %p106
      $region22: #{lenet5_forward.1} parent=11 // pred_check_branch
        %302 = sbr.rel (%p300) target = $region24
      $region23: #{lenet5_forward.1} parent=11 // pred_region
        _
      $region24: #{lenet5_forward.1} parent=11 // pred_fallthru
        _
      // Predicated region
      $region25: #{lenet5_forward.1} parent=11 // pred_check
        %p303 = pneg %p127
      $region26: #{lenet5_forward.1} parent=11 // pred_check_branch
        %305 = sbr.rel (%p303) target = $region28
      $region27: #{lenet5_forward.1} parent=11 // pred_region
        _
      $region28: #{lenet5_forward.1} parent=11 // pred_fallthru
        _
      // Predicated region
      $region29: #{lenet5_forward.1} parent=11 // pred_check
        %p306 = pneg %p148
      $region30: #{lenet5_forward.1} parent=11 // pred_check_branch
        %308 = sbr.rel (%p306) target = $region32
      $region31: #{lenet5_forward.1} parent=11 // pred_region
        _
      $region32: #{lenet5_forward.1} parent=11 // pred_fallthru
        _
      // Predicated region
      $region33: #{lenet5_forward.1} parent=11 // pred_check
        %p309 = pneg %p169
      $region34: #{lenet5_forward.1} parent=11 // pred_check_branch
        %311 = sbr.rel (%p309) target = $region36
      $region35: #{lenet5_forward.1} parent=11 // pred_region
        _
      $region36: #{lenet5_forward.1} parent=11 // pred_fallthru
        _
      // Predicated region
      $region37: #{lenet5_forward.1} parent=11 // pred_check
        %p312 = pneg %p190
      $region38: #{lenet5_forward.1} parent=11 // pred_check_branch
        %314 = sbr.rel (%p312) target = $region40
      $region39: #{lenet5_forward.1} parent=11 // pred_region
        _
      $region40: #{lenet5_forward.1} parent=11 // pred_fallthru
        _
      // Predicated region
      $region41: #{lenet5_forward.1} parent=11 // pred_check
        %p315 = pneg %p211
      $region42: #{lenet5_forward.1} parent=11 // pred_check_branch
        %317 = sbr.rel (%p315) target = $region44
      $region43: #{lenet5_forward.1} parent=11 // pred_region
        _
      $region44: #{lenet5_forward.1} parent=11 // pred_fallthru
        _
      // Predicated region
      $region45: #{lenet5_forward.1} parent=11 // pred_check
        %p318 = pneg %p232
      $region46: #{lenet5_forward.1} parent=11 // pred_check_branch
        %320 = sbr.rel (%p318) target = $region48
      $region47: #{lenet5_forward.1} parent=11 // pred_region
        _
      $region48: #{lenet5_forward.1} parent=11 // pred_fallthru
        _
      // Predicated region
      $region49: #{lenet5_forward.1} parent=11 // pred_check
        %p321 = pneg %p253
      $region50: #{lenet5_forward.1} parent=11 // pred_check_branch
        %323 = sbr.rel (%p321) target = $region52
      $region51: #{lenet5_forward.1} parent=11 // pred_region
        _
      $region52: #{lenet5_forward.1} parent=11 // pred_fallthru
        _
    $region12: #{lenet5_forward.1} parent=5 // pred_fallthru
      _
    %p324 = scmp.lt.s32.totalorder %s17, 2
    // Predicated region
    $region53: #{lenet5_forward.1} parent=5 // pred_check
      %p325 = pneg %p324
    $region54: #{lenet5_forward.1} parent=5 // pred_check_branch
      %327 = sbr.rel (%p325) target = $region56
    $region55: #{lenet5_forward.1} parent=5 // pred_region
      // Predicated region
      $region57: #{lenet5_forward.1} parent=55 // pred_check
        %p328 = pneg %p37
      $region58: #{lenet5_forward.1} parent=55 // pred_check_branch
        %330 = sbr.rel (%p328) target = $region60
      $region59: #{lenet5_forward.1} parent=55 // pred_region
        %p331 = scmp.lt.s32.totalorder %s17, 1
        %s332 = scalar_select %p331, %s17, 1
        %s333 = smul.addr %s332, 4
        %s334 = smul.addr %s333, 8
        %s335 = scalar_lea.vmem %s0, %s334
      $region60: #{lenet5_forward.1} parent=55 // pred_fallthru
        _
    $region56: #{lenet5_forward.1} parent=5 // pred_fallthru
      _
    %p336 = scmp.le.s32.totalorder 1, %s17
    %p337 = scmp.lt.s32.totalorder %s17, 3
    %p338 = pnand %p336, %p337
    %p339 = pneg %p338
    // Predicated region
    $region61: #{lenet5_forward.1} parent=5 // pred_check
      _
    $region62: #{lenet5_forward.1} parent=5 // pred_check_branch
      %341 = sbr.rel (%p338) target = $region64
    $region63: #{lenet5_forward.1} parent=5 // pred_region
      %s342 = ssub.s32 %s17, 1
      %p343 = scmp.lt.s32.totalorder %s22, 1
      %s344 = scalar_select %p343, %s22, 1
      %s345 = smul.addr %s344, 4
      %s346 = smul.addr %s345, 8
      %s347 = scalar_lea.vmem %s0, %s346
      %p348 = pneg %p43
      %p349 = pneg %p40
      %p350 = pneg %p64
      %p351 = pneg %p61
      %p352 = pneg %p85
      %p353 = pneg %p82
      %p354 = pneg %p106
      %p355 = pneg %p103
      %p356 = pneg %p127
      %p357 = pneg %p124
      %p358 = pneg %p148
      %p359 = pneg %p145
      %p360 = pneg %p169
      %p361 = pneg %p166
      %p362 = pneg %p190
      %p363 = pneg %p187
      %p364 = pneg %p211
      %p365 = pneg %p208
      %p366 = pneg %p232
      %p367 = pneg %p229
      %p368 = pneg %p253
      %p369 = pneg %p250
      %p370 = pneg %p279
      %p371 = pneg %p276
      %p372 = scmp.lt.s32.totalorder %s22, 1
      %s373 = scalar_select %p372, %s22, 1
      %s374 = smul.addr %s373, 2
      %s375 = smul.addr %s374, 8
      %s376 = scalar_lea.vmem %s11, %s375
      %p377 = scmp.lt.s32.totalorder %s22, 1
      %s378 = scalar_select %p377, %s22, 1
      %s379 = smul.addr %s378, 4
      %s380 = smul.addr %s379, 8
      %s381 = scalar_lea.vmem %s0, %s380
      %p382 = scmp.lt.s32.totalorder %s22, 1
      %s383 = scalar_select %p382, %s22, 1
      %s384 = smul.addr %s383, 2
      %s385 = smul.addr %s384, 8
      %s386 = scalar_lea.vmem %s11, %s385
      %v387 = vld [vmem:[%s381] sm:$0xff]
      %v388 = vld [vmem:[%s381 + $0x8] sm:$0xff]
      %v389 = vld [vmem:[%s381 + $0x10] sm:$0xff]
      %v390 = vld [vmem:[%s381 + $0x18] sm:$0xff]
      %v391 = vld [vmem:[%s1] sm:$0xff]
      %v392 = vld [vmem:[%s1 + $0x8] sm:$0xff]
      %v393 = vld [vmem:[%s1 + $0x10] sm:$0xff]
      %v394 = vld [vmem:[%s1 + $0x18] sm:$0xff]
      %v395 = vld [vmem:[%s1 + $0x20] sm:$0xff]
      %v396 = vld [vmem:[%s1 + $0x28] sm:$0xff]
      %v397 = vld [vmem:[%s1 + $0x30] sm:$0xff]
      %v398 = vld [vmem:[%s1 + $0x38] sm:$0xff]
      %v399 = vld [vmem:[%s1 + $0x40] sm:$0xff]
      %v400 = vld [vmem:[%s1 + $0x48] sm:$0xff]
      %v401 = vld [vmem:[%s1 + $0x50] sm:$0xf]
      %s402 = scalar_lea.vmem %s1, 88
      %v403 = vld [vmem:[%s402] sm:$0xff]
      %v404 = vld [vmem:[%s402 + $0x8] sm:$0xff]
      %v405 = vld [vmem:[%s402 + $0x10] sm:$0xff]
      %v406 = vld [vmem:[%s402 + $0x18] sm:$0xff]
      %v407 = vld [vmem:[%s402 + $0x20] sm:$0xff]
      %v408 = vld [vmem:[%s402 + $0x28] sm:$0xff]
      %v409 = vld [vmem:[%s402 + $0x30] sm:$0xff]
      %v410 = vld [vmem:[%s402 + $0x38] sm:$0xff]
      %v411 = vld [vmem:[%s402 + $0x40] sm:$0xff]
      %v412 = vld [vmem:[%s402 + $0x48] sm:$0xff]
      %v413 = vld [vmem:[%s402 + $0x50] sm:$0xf]
      %418 = vrot.lane.b32.xlu0 %v387, 127
      %v419 = vpop.permute.xlu0 %418
      %420 = vrot.lane.b32.xlu0 %v388, 127
      %v421 = vpop.permute.xlu0 %420
      %422 = vrot.lane.b32.xlu0 %v389, 127
      %v423 = vpop.permute.xlu0 %422
      %424 = vrot.lane.b32.xlu0 %v390, 127
      %v425 = vpop.permute.xlu0 %424
      %vm430 = vcmask 261120
      %v432 = vsel %vm430, %v403, 0
      %v435 = vsel %vm430, %v404, 0
      %v438 = vsel %vm430, %v405, 0
      %v441 = vsel %vm430, %v406, 0
      %v444 = vsel %vm430, %v407, 0
      %v447 = vsel %vm430, %v408, 0
      %v450 = vsel %vm430, %v409, 0
      %v453 = vsel %vm430, %v410, 0
      %v456 = vsel %vm430, %v411, 0
      %v459 = vsel %vm430, %v412, 0
      %v462 = vsel %vm430, %v413, 0
      %464 = vmatpush.msra.mxu0 0.0
      %465 = vmatpush.msra.mxu0 0.0
      %466 = vmatpush.msra.mxu0 0.0
      %467 = vmatpush.msra.mxu0 0.0
      %468 = vmatpush.msra.mxu0 0.0
      %469 = vmatpush.msra.mxu0 0.0
      %470 = vmatpush.msra.mxu0 0.0
      %471 = vmatpush.msra.mxu0 0.0
      %472 = vmatpush.msra.mxu0 0.0
      %473 = vmatpush.msra.mxu0 0.0
      %474 = vmatpush.msra.mxu0 0.0
      %475 = vmatpush.msra.mxu0 0.0
      %476 = vmatpush.msra.mxu0 %v425
      %477 = vmatpush.msra.mxu0 %v423
      %478 = vmatpush.msra.mxu0 %v421
      %479 = vmatpush.msra.mxu0 %v419
      %480 = vmatmul.f32.gmra.mxu0 %v432
      %v481 = vpop.f32.mrf.mxu0
      %v482 = vadd.f32 0.0, %v481
      %483 = vmatmul.f32.gmra.mxu0 %v435
      %v484 = vpop.f32.mrf.mxu0
      %v485 = vadd.f32 0.0, %v484
      %486 = vmatmul.f32.gmra.mxu0 %v438
      %v487 = vpop.f32.mrf.mxu0
      %v488 = vadd.f32 0.0, %v487
      %489 = vmatmul.f32.gmra.mxu0 %v441
      %v490 = vpop.f32.mrf.mxu0
      %v491 = vadd.f32 0.0, %v490
      %492 = vmatmul.f32.gmra.mxu0 %v444
      %v493 = vpop.f32.mrf.mxu0
      %v494 = vadd.f32 0.0, %v493
      %495 = vmatmul.f32.gmra.mxu0 %v447
      %v496 = vpop.f32.mrf.mxu0
      %v497 = vadd.f32 0.0, %v496
      %498 = vmatmul.f32.gmra.mxu0 %v450
      %v499 = vpop.f32.mrf.mxu0
      %v500 = vadd.f32 0.0, %v499
      %501 = vmatmul.f32.gmra.mxu0 %v453
      %v502 = vpop.f32.mrf.mxu0
      %v503 = vadd.f32 0.0, %v502
      %504 = vmatmul.f32.gmra.mxu0 %v456
      %v505 = vpop.f32.mrf.mxu0
      %v506 = vadd.f32 0.0, %v505
      %507 = vmatmul.f32.gmra.mxu0 %v459
      %v508 = vpop.f32.mrf.mxu0
      %v509 = vadd.f32 0.0, %v508
      %510 = vmatmul.f32.gmra.mxu0 %v462
      %v511 = vpop.f32.mrf.mxu0
      %v512 = vadd.f32 0.0, %v511
      %513 = vdwg.mxu0
      %v515 = vsel %vm430, %v391, 0
      %v518 = vsel %vm430, %v392, 0
      %v521 = vsel %vm430, %v393, 0
      %v524 = vsel %vm430, %v394, 0
      %v527 = vsel %vm430, %v395, 0
      %v530 = vsel %vm430, %v396, 0
      %v533 = vsel %vm430, %v397, 0
      %v536 = vsel %vm430, %v398, 0
      %v539 = vsel %vm430, %v399, 0
      %v542 = vsel %vm430, %v400, 0
      %v545 = vsel %vm430, %v401, 0
      %547 = vmatpush.msra.mxu0 0.0
      %548 = vmatpush.msra.mxu0 0.0
      %549 = vmatpush.msra.mxu0 0.0
      %550 = vmatpush.msra.mxu0 0.0
      %551 = vmatpush.msra.mxu0 0.0
      %552 = vmatpush.msra.mxu0 0.0
      %553 = vmatpush.msra.mxu0 0.0
      %554 = vmatpush.msra.mxu0 0.0
      %555 = vmatpush.msra.mxu0 0.0
      %556 = vmatpush.msra.mxu0 0.0
      %557 = vmatpush.msra.mxu0 0.0
      %558 = vmatpush.msra.mxu0 0.0
      %559 = vmatpush.msra.mxu0 %v390
      %560 = vmatpush.msra.mxu0 %v389
      %561 = vmatpush.msra.mxu0 %v388
      %562 = vmatpush.msra.mxu0 %v387
      %563 = vmatmul.f32.gmra.mxu0 %v515
      %v564 = vpop.f32.mrf.mxu0
      %v565 = vadd.f32 %v482, %v564
      %566 = vmatmul.f32.gmra.mxu0 %v518
      %v567 = vpop.f32.mrf.mxu0
      %v568 = vadd.f32 %v485, %v567
      %569 = vmatmul.f32.gmra.mxu0 %v521
      %v570 = vpop.f32.mrf.mxu0
      %v571 = vadd.f32 %v488, %v570
      %572 = vmatmul.f32.gmra.mxu0 %v524
      %v573 = vpop.f32.mrf.mxu0
      %v574 = vadd.f32 %v491, %v573
      %575 = vmatmul.f32.gmra.mxu0 %v527
      %v576 = vpop.f32.mrf.mxu0
      %v577 = vadd.f32 %v494, %v576
      %578 = vmatmul.f32.gmra.mxu0 %v530
      %v579 = vpop.f32.mrf.mxu0
      %v580 = vadd.f32 %v497, %v579
      %581 = vmatmul.f32.gmra.mxu0 %v533
      %v582 = vpop.f32.mrf.mxu0
      %v583 = vadd.f32 %v500, %v582
      %584 = vmatmul.f32.gmra.mxu0 %v536
      %v585 = vpop.f32.mrf.mxu0
      %v586 = vadd.f32 %v503, %v585
      %587 = vmatmul.f32.gmra.mxu0 %v539
      %v588 = vpop.f32.mrf.mxu0
      %v589 = vadd.f32 %v506, %v588
      %590 = vmatmul.f32.gmra.mxu0 %v542
      %v591 = vpop.f32.mrf.mxu0
      %v592 = vadd.f32 %v509, %v591
      %593 = vmatmul.f32.gmra.mxu0 %v545
      %v594 = vpop.f32.mrf.mxu0
      %v595 = vadd.f32 %v512, %v594
      %596 = vdwg.mxu0
      %s597 = scalar_lea.vmem %s1, 176
      %v598 = vld [vmem:[%s597] sm:$0xff]
      %v599 = vld [vmem:[%s597 + $0x8] sm:$0xff]
      %v600 = vld [vmem:[%s597 + $0x10] sm:$0xff]
      %v601 = vld [vmem:[%s597 + $0x18] sm:$0xff]
      %v602 = vld [vmem:[%s597 + $0x20] sm:$0xff]
      %v603 = vld [vmem:[%s597 + $0x28] sm:$0xff]
      %v604 = vld [vmem:[%s597 + $0x30] sm:$0xff]
      %v605 = vld [vmem:[%s597 + $0x38] sm:$0xff]
      %v606 = vld [vmem:[%s597 + $0x40] sm:$0xff]
      %v607 = vld [vmem:[%s597 + $0x48] sm:$0xff]
      %v608 = vld [vmem:[%s597 + $0x50] sm:$0xf]
      %609 = vrot.lane.b32.xlu0 %v387, 126
      %v610 = vpop.permute.xlu0 %609
      %611 = vrot.lane.b32.xlu0 %v388, 126
      %v612 = vpop.permute.xlu0 %611
      %613 = vrot.lane.b32.xlu0 %v389, 126
      %v614 = vpop.permute.xlu0 %613
      %615 = vrot.lane.b32.xlu0 %v390, 126
      %v616 = vpop.permute.xlu0 %615
      %v622 = vsel %vm430, %v598, 0
      %v625 = vsel %vm430, %v599, 0
      %v628 = vsel %vm430, %v600, 0
      %v631 = vsel %vm430, %v601, 0
      %v634 = vsel %vm430, %v602, 0
      %v637 = vsel %vm430, %v603, 0
      %v640 = vsel %vm430, %v604, 0
      %v643 = vsel %vm430, %v605, 0
      %v646 = vsel %vm430, %v606, 0
      %v649 = vsel %vm430, %v607, 0
      %v652 = vsel %vm430, %v608, 0
      %654 = vmatpush.msra.mxu0 0.0
      %655 = vmatpush.msra.mxu0 0.0
      %656 = vmatpush.msra.mxu0 0.0
      %657 = vmatpush.msra.mxu0 0.0
      %658 = vmatpush.msra.mxu0 0.0
      %659 = vmatpush.msra.mxu0 0.0
      %660 = vmatpush.msra.mxu0 0.0
      %661 = vmatpush.msra.mxu0 0.0
      %662 = vmatpush.msra.mxu0 0.0
      %663 = vmatpush.msra.mxu0 0.0
      %664 = vmatpush.msra.mxu0 0.0
      %665 = vmatpush.msra.mxu0 0.0
      %666 = vmatpush.msra.mxu0 %v616
      %667 = vmatpush.msra.mxu0 %v614
      %668 = vmatpush.msra.mxu0 %v612
      %669 = vmatpush.msra.mxu0 %v610
      %670 = vmatmul.f32.gmra.mxu0 %v622
      %v671 = vpop.f32.mrf.mxu0
      %v672 = vadd.f32 0.0, %v671
      %673 = vmatmul.f32.gmra.mxu0 %v625
      %v674 = vpop.f32.mrf.mxu0
      %v675 = vadd.f32 0.0, %v674
      %676 = vmatmul.f32.gmra.mxu0 %v628
      %v677 = vpop.f32.mrf.mxu0
      %v678 = vadd.f32 0.0, %v677
      %679 = vmatmul.f32.gmra.mxu0 %v631
      %v680 = vpop.f32.mrf.mxu0
      %v681 = vadd.f32 0.0, %v680
      %682 = vmatmul.f32.gmra.mxu0 %v634
      %v683 = vpop.f32.mrf.mxu0
      %v684 = vadd.f32 0.0, %v683
      %685 = vmatmul.f32.gmra.mxu0 %v637
      %v686 = vpop.f32.mrf.mxu0
      %v687 = vadd.f32 0.0, %v686
      %688 = vmatmul.f32.gmra.mxu0 %v640
      %v689 = vpop.f32.mrf.mxu0
      %v690 = vadd.f32 0.0, %v689
      %691 = vmatmul.f32.gmra.mxu0 %v643
      %v692 = vpop.f32.mrf.mxu0
      %v693 = vadd.f32 0.0, %v692
      %694 = vmatmul.f32.gmra.mxu0 %v646
      %v695 = vpop.f32.mrf.mxu0
      %v696 = vadd.f32 0.0, %v695
      %697 = vmatmul.f32.gmra.mxu0 %v649
      %v698 = vpop.f32.mrf.mxu0
      %v699 = vadd.f32 0.0, %v698
      %700 = vmatmul.f32.gmra.mxu0 %v652
      %v701 = vpop.f32.mrf.mxu0
      %v702 = vadd.f32 0.0, %v701
      %703 = vdwg.mxu0
      %v704 = vadd.f32 %v565, %v672
      %v705 = vadd.f32 %v568, %v675
      %v706 = vadd.f32 %v571, %v678
      %v707 = vadd.f32 %v574, %v681
      %v708 = vadd.f32 %v577, %v684
      %v709 = vadd.f32 %v580, %v687
      %v710 = vadd.f32 %v583, %v690
      %v711 = vadd.f32 %v586, %v693
      %v712 = vadd.f32 %v589, %v696
      %v713 = vadd.f32 %v592, %v699
      %v714 = vadd.f32 %v595, %v702
      %s715 = scalar_lea.vmem %s1, 264
      %v716 = vld [vmem:[%s715] sm:$0xff]
      %v717 = vld [vmem:[%s715 + $0x8] sm:$0xff]
      %v718 = vld [vmem:[%s715 + $0x10] sm:$0xff]
      %v719 = vld [vmem:[%s715 + $0x18] sm:$0xff]
      %v720 = vld [vmem:[%s715 + $0x20] sm:$0xff]
      %v721 = vld [vmem:[%s715 + $0x28] sm:$0xff]
      %v722 = vld [vmem:[%s715 + $0x30] sm:$0xff]
      %v723 = vld [vmem:[%s715 + $0x38] sm:$0xff]
      %v724 = vld [vmem:[%s715 + $0x40] sm:$0xff]
      %v725 = vld [vmem:[%s715 + $0x48] sm:$0xff]
      %v726 = vld [vmem:[%s715 + $0x50] sm:$0xf]
      %727 = vrot.lane.b32.xlu0 %v387, 125
      %v728 = vpop.permute.xlu0 %727
      %729 = vrot.lane.b32.xlu0 %v388, 125
      %v730 = vpop.permute.xlu0 %729
      %731 = vrot.lane.b32.xlu0 %v389, 125
      %v732 = vpop.permute.xlu0 %731
      %733 = vrot.lane.b32.xlu0 %v390, 125
      %v734 = vpop.permute.xlu0 %733
      %v740 = vsel %vm430, %v716, 0
      %v743 = vsel %vm430, %v717, 0
      %v746 = vsel %vm430, %v718, 0
      %v749 = vsel %vm430, %v719, 0
      %v752 = vsel %vm430, %v720, 0
      %v755 = vsel %vm430, %v721, 0
      %v758 = vsel %vm430, %v722, 0
      %v761 = vsel %vm430, %v723, 0
      %v764 = vsel %vm430, %v724, 0
      %v767 = vsel %vm430, %v725, 0
      %v770 = vsel %vm430, %v726, 0
      %772 = vmatpush.msra.mxu0 0.0
      %773 = vmatpush.msra.mxu0 0.0
      %774 = vmatpush.msra.mxu0 0.0
      %775 = vmatpush.msra.mxu0 0.0
      %776 = vmatpush.msra.mxu0 0.0
      %777 = vmatpush.msra.mxu0 0.0
      %778 = vmatpush.msra.mxu0 0.0
      %779 = vmatpush.msra.mxu0 0.0
      %780 = vmatpush.msra.mxu0 0.0
      %781 = vmatpush.msra.mxu0 0.0
      %782 = vmatpush.msra.mxu0 0.0
      %783 = vmatpush.msra.mxu0 0.0
      %784 = vmatpush.msra.mxu0 %v734
      %785 = vmatpush.msra.mxu0 %v732
      %786 = vmatpush.msra.mxu0 %v730
      %787 = vmatpush.msra.mxu0 %v728
      %788 = vmatmul.f32.gmra.mxu0 %v740
      %v789 = vpop.f32.mrf.mxu0
      %v790 = vadd.f32 0.0, %v789
      %791 = vmatmul.f32.gmra.mxu0 %v743
      %v792 = vpop.f32.mrf.mxu0
      %v793 = vadd.f32 0.0, %v792
      %794 = vmatmul.f32.gmra.mxu0 %v746
      %v795 = vpop.f32.mrf.mxu0
      %v796 = vadd.f32 0.0, %v795
      %797 = vmatmul.f32.gmra.mxu0 %v749
      %v798 = vpop.f32.mrf.mxu0
      %v799 = vadd.f32 0.0, %v798
      %800 = vmatmul.f32.gmra.mxu0 %v752
      %v801 = vpop.f32.mrf.mxu0
      %v802 = vadd.f32 0.0, %v801
      %803 = vmatmul.f32.gmra.mxu0 %v755
      %v804 = vpop.f32.mrf.mxu0
      %v805 = vadd.f32 0.0, %v804
      %806 = vmatmul.f32.gmra.mxu0 %v758
      %v807 = vpop.f32.mrf.mxu0
      %v808 = vadd.f32 0.0, %v807
      %809 = vmatmul.f32.gmra.mxu0 %v761
      %v810 = vpop.f32.mrf.mxu0
      %v811 = vadd.f32 0.0, %v810
      %812 = vmatmul.f32.gmra.mxu0 %v764
      %v813 = vpop.f32.mrf.mxu0
      %v814 = vadd.f32 0.0, %v813
      %815 = vmatmul.f32.gmra.mxu0 %v767
      %v816 = vpop.f32.mrf.mxu0
      %v817 = vadd.f32 0.0, %v816
      %818 = vmatmul.f32.gmra.mxu0 %v770
      %v819 = vpop.f32.mrf.mxu0
      %v820 = vadd.f32 0.0, %v819
      %821 = vdwg.mxu0
      %v822 = vadd.f32 %v704, %v790
      %v823 = vadd.f32 %v705, %v793
      %v824 = vadd.f32 %v706, %v796
      %v825 = vadd.f32 %v707, %v799
      %v826 = vadd.f32 %v708, %v802
      %v827 = vadd.f32 %v709, %v805
      %v828 = vadd.f32 %v710, %v808
      %v829 = vadd.f32 %v711, %v811
      %v830 = vadd.f32 %v712, %v814
      %v831 = vadd.f32 %v713, %v817
      %v832 = vadd.f32 %v714, %v820
      %s833 = scalar_lea.vmem %s1, 352
      %v834 = vld [vmem:[%s833] sm:$0xff]
      %v835 = vld [vmem:[%s833 + $0x8] sm:$0xff]
      %v836 = vld [vmem:[%s833 + $0x10] sm:$0xff]
      %v837 = vld [vmem:[%s833 + $0x18] sm:$0xff]
      %v838 = vld [vmem:[%s833 + $0x20] sm:$0xff]
      %v839 = vld [vmem:[%s833 + $0x28] sm:$0xff]
      %v840 = vld [vmem:[%s833 + $0x30] sm:$0xff]
      %v841 = vld [vmem:[%s833 + $0x38] sm:$0xff]
      %v842 = vld [vmem:[%s833 + $0x40] sm:$0xff]
      %v843 = vld [vmem:[%s833 + $0x48] sm:$0xff]
      %v844 = vld [vmem:[%s833 + $0x50] sm:$0xf]
      %845 = vrot.lane.b32.xlu0 %v387, 124
      %v846 = vpop.permute.xlu0 %845
      %847 = vrot.lane.b32.xlu0 %v388, 124
      %v848 = vpop.permute.xlu0 %847
      %849 = vrot.lane.b32.xlu0 %v389, 124
      %v850 = vpop.permute.xlu0 %849
      %851 = vrot.lane.b32.xlu0 %v390, 124
      %v852 = vpop.permute.xlu0 %851
      %v858 = vsel %vm430, %v834, 0
      %v861 = vsel %vm430, %v835, 0
      %v864 = vsel %vm430, %v836, 0
      %v867 = vsel %vm430, %v837, 0
      %v870 = vsel %vm430, %v838, 0
      %v873 = vsel %vm430, %v839, 0
      %v876 = vsel %vm430, %v840, 0
      %v879 = vsel %vm430, %v841, 0
      %v882 = vsel %vm430, %v842, 0
      %v885 = vsel %vm430, %v843, 0
      %v888 = vsel %vm430, %v844, 0
      %890 = vmatpush.msra.mxu0 0.0
      %891 = vmatpush.msra.mxu0 0.0
      %892 = vmatpush.msra.mxu0 0.0
      %893 = vmatpush.msra.mxu0 0.0
      %894 = vmatpush.msra.mxu0 0.0
      %895 = vmatpush.msra.mxu0 0.0
      %896 = vmatpush.msra.mxu0 0.0
      %897 = vmatpush.msra.mxu0 0.0
      %898 = vmatpush.msra.mxu0 0.0
      %899 = vmatpush.msra.mxu0 0.0
      %900 = vmatpush.msra.mxu0 0.0
      %901 = vmatpush.msra.mxu0 0.0
      %902 = vmatpush.msra.mxu0 %v852
      %903 = vmatpush.msra.mxu0 %v850
      %904 = vmatpush.msra.mxu0 %v848
      %905 = vmatpush.msra.mxu0 %v846
      %906 = vmatmul.f32.gmra.mxu0 %v858
      %v907 = vpop.f32.mrf.mxu0
      %v908 = vadd.f32 0.0, %v907
      %909 = vmatmul.f32.gmra.mxu0 %v861
      %v910 = vpop.f32.mrf.mxu0
      %v911 = vadd.f32 0.0, %v910
      %912 = vmatmul.f32.gmra.mxu0 %v864
      %v913 = vpop.f32.mrf.mxu0
      %v914 = vadd.f32 0.0, %v913
      %915 = vmatmul.f32.gmra.mxu0 %v867
      %v916 = vpop.f32.mrf.mxu0
      %v917 = vadd.f32 0.0, %v916
      %918 = vmatmul.f32.gmra.mxu0 %v870
      %v919 = vpop.f32.mrf.mxu0
      %v920 = vadd.f32 0.0, %v919
      %921 = vmatmul.f32.gmra.mxu0 %v873
      %v922 = vpop.f32.mrf.mxu0
      %v923 = vadd.f32 0.0, %v922
      %924 = vmatmul.f32.gmra.mxu0 %v876
      %v925 = vpop.f32.mrf.mxu0
      %v926 = vadd.f32 0.0, %v925
      %927 = vmatmul.f32.gmra.mxu0 %v879
      %v928 = vpop.f32.mrf.mxu0
      %v929 = vadd.f32 0.0, %v928
      %930 = vmatmul.f32.gmra.mxu0 %v882
      %v931 = vpop.f32.mrf.mxu0
      %v932 = vadd.f32 0.0, %v931
      %933 = vmatmul.f32.gmra.mxu0 %v885
      %v934 = vpop.f32.mrf.mxu0
      %v935 = vadd.f32 0.0, %v934
      %936 = vmatmul.f32.gmra.mxu0 %v888
      %v937 = vpop.f32.mrf.mxu0
      %v938 = vadd.f32 0.0, %v937
      %939 = vdwg.mxu0
      %v940 = vadd.f32 %v822, %v908
      %v941 = vadd.f32 %v823, %v911
      %v942 = vadd.f32 %v824, %v914
      %v943 = vadd.f32 %v825, %v917
      %v944 = vadd.f32 %v826, %v920
      %v945 = vadd.f32 %v827, %v923
      %v946 = vadd.f32 %v828, %v926
      %v947 = vadd.f32 %v829, %v929
      %v948 = vadd.f32 %v830, %v932
      %v949 = vadd.f32 %v831, %v935
      %v950 = vadd.f32 %v832, %v938
      %v951 = vlaneseq
      %v952 = vshrl.u32 %v951, 7
      %v953 = vadd.s32 %v952, 8
      %v954 = vadd.s32 %v952, 16
      %v955 = vadd.s32 %v952, 24
      %v956 = vlaneseq
      %v957 = vand.u32 %v956, 127
      %v958 = vmul.u32 %v957, 2
      %vm959 = vcmp.eq.s32.totalorder %v952, %v958
      %vm960 = vcmp.eq.s32.totalorder %v953, %v958
      %vm961 = vcmp.eq.s32.totalorder %v954, %v958
      %vm962 = vcmp.eq.s32.totalorder %v955, %v958
      %v963 = vadd.s32 %v958, 1
      %vm964 = vcmp.eq.s32.totalorder %v952, %v963
      %vm965 = vcmp.eq.s32.totalorder %v953, %v963
      %vm966 = vcmp.eq.s32.totalorder %v954, %v963
      %vm967 = vcmp.eq.s32.totalorder %v955, %v963
      %vm968 = vmor %vm959, %vm964
      %vm969 = vmor %vm960, %vm965
      %vm970 = vmor %vm961, %vm966
      %vm971 = vmor %vm962, %vm967
      %v972 = vsel %vm968, 0.5, 0.0
      %v973 = vsel %vm969, 0.5, 0.0
      %v974 = vsel %vm970, 0.5, 0.0
      %v975 = vsel %vm971, 0.5, 0.0
      %v976 = vld [vmem:[%s2] sm:$0xff]
      %v977 = vld [vmem:[%s2 + $0x8] sm:$0xff]
      %v978 = vld [vmem:[%s2 + $0x10] sm:$0xff]
      %v979 = vld [vmem:[%s2 + $0x18] sm:$0xff]
      %v980 = vld [vmem:[%s2 + $0x20] sm:$0xff]
      %v981 = vld [vmem:[%s2 + $0x28] sm:$0xff]
      %v982 = vld [vmem:[%s2 + $0x30] sm:$0xff]
      %v983 = vld [vmem:[%s2 + $0x38] sm:$0xff]
      %v984 = vld [vmem:[%s2 + $0x40] sm:$0xff]
      %v985 = vld [vmem:[%s2 + $0x48] sm:$0xff]
      %v986 = vld [vmem:[%s2 + $0x50] sm:$0xf]
      %988 = vset.pattern.permute.xlu0 0
      %989 = vperm.xlu0 %988, %v976
      %v990 = vpop.permute.xlu0 %989
      %993 = vset.pattern.permute.xlu0 0
      %994 = vperm.xlu0 %993, %v977
      %v995 = vpop.permute.xlu0 %994
      %998 = vset.pattern.permute.xlu0 0
      %999 = vperm.xlu0 %998, %v978
      %v1000 = vpop.permute.xlu0 %999
      %1003 = vset.pattern.permute.xlu0 0
      %1004 = vperm.xlu0 %1003, %v979
      %v1005 = vpop.permute.xlu0 %1004
      %1008 = vset.pattern.permute.xlu0 0
      %1009 = vperm.xlu0 %1008, %v980
      %v1010 = vpop.permute.xlu0 %1009
      %1013 = vset.pattern.permute.xlu0 0
      %1014 = vperm.xlu0 %1013, %v981
      %v1015 = vpop.permute.xlu0 %1014
      %1018 = vset.pattern.permute.xlu0 0
      %1019 = vperm.xlu0 %1018, %v982
      %v1020 = vpop.permute.xlu0 %1019
      %1023 = vset.pattern.permute.xlu0 0
      %1024 = vperm.xlu0 %1023, %v983
      %v1025 = vpop.permute.xlu0 %1024
      %1028 = vset.pattern.permute.xlu0 0
      %1029 = vperm.xlu0 %1028, %v984
      %v1030 = vpop.permute.xlu0 %1029
      %1033 = vset.pattern.permute.xlu0 0
      %1034 = vperm.xlu0 %1033, %v985
      %v1035 = vpop.permute.xlu0 %1034
      %1038 = vset.pattern.permute.xlu0 0
      %1039 = vperm.xlu0 %1038, %v986
      %v1040 = vpop.permute.xlu0 %1039
      %vm1042 = vcmask 228352
      %v1044 = vsel %vm1042, %v940, 0
      %v1047 = vsel %vm1042, %v941, 0
      %v1050 = vsel %vm1042, %v942, 0
      %v1053 = vsel %vm1042, %v943, 0
      %v1056 = vsel %vm1042, %v944, 0
      %v1059 = vsel %vm1042, %v945, 0
      %v1062 = vsel %vm1042, %v946, 0
      %v1065 = vsel %vm1042, %v947, 0
      %v1068 = vsel %vm1042, %v948, 0
      %v1071 = vsel %vm1042, %v949, 0
      %v1074 = vsel %vm1042, %v950, 0
      %vm1076 = vcmask 1043456
      %v1078 = vsel %vm1076, %v975, 0
      %1080 = vmatpush.msra.mxu0 0.0
      %1081 = vmatpush.msra.mxu0 0.0
      %1082 = vmatpush.msra.mxu0 0.0
      %1083 = vmatpush.msra.mxu0 0.0
      %1084 = vmatpush.msra.mxu0 0.0
      %1085 = vmatpush.msra.mxu0 0.0
      %1086 = vmatpush.msra.mxu0 0.0
      %1087 = vmatpush.msra.mxu0 0.0
      %1088 = vmatpush.msra.mxu0 0.0
      %1089 = vmatpush.msra.mxu0 0.0
      %1090 = vmatpush.msra.mxu0 0.0
      %1091 = vmatpush.msra.mxu0 0.0
      %1092 = vmatpush.msra.mxu0 %v1078
      %1093 = vmatpush.msra.mxu0 %v974
      %1094 = vmatpush.msra.mxu0 %v973
      %1095 = vmatpush.msra.mxu0 %v972
      %1096 = vmatmul.f32.gmra.mxu0 %v1044
      %v1097 = vpop.f32.mrf.mxu0
      %v1098 = vadd.f32 %v990, %v1097
      %1099 = vmatmul.f32.gmra.mxu0 %v1047
      %v1100 = vpop.f32.mrf.mxu0
      %v1101 = vadd.f32 %v995, %v1100
      %1102 = vmatmul.f32.gmra.mxu0 %v1050
      %v1103 = vpop.f32.mrf.mxu0
      %v1104 = vadd.f32 %v1000, %v1103
      %1105 = vmatmul.f32.gmra.mxu0 %v1053
      %v1106 = vpop.f32.mrf.mxu0
      %v1107 = vadd.f32 %v1005, %v1106
      %1108 = vmatmul.f32.gmra.mxu0 %v1056
      %v1109 = vpop.f32.mrf.mxu0
      %v1110 = vadd.f32 %v1010, %v1109
      %1111 = vmatmul.f32.gmra.mxu0 %v1059
      %v1112 = vpop.f32.mrf.mxu0
      %v1113 = vadd.f32 %v1015, %v1112
      %1114 = vmatmul.f32.gmra.mxu0 %v1062
      %v1115 = vpop.f32.mrf.mxu0
      %v1116 = vadd.f32 %v1020, %v1115
      %1117 = vmatmul.f32.gmra.mxu0 %v1065
      %v1118 = vpop.f32.mrf.mxu0
      %v1119 = vadd.f32 %v1025, %v1118
      %1120 = vmatmul.f32.gmra.mxu0 %v1068
      %v1121 = vpop.f32.mrf.mxu0
      %v1122 = vadd.f32 %v1030, %v1121
      %1123 = vmatmul.f32.gmra.mxu0 %v1071
      %v1124 = vpop.f32.mrf.mxu0
      %v1125 = vadd.f32 %v1035, %v1124
      %1126 = vmatmul.f32.gmra.mxu0 %v1074
      %v1127 = vpop.f32.mrf.mxu0
      %v1128 = vadd.f32 %v1040, %v1127
      %1129 = vdwg.mxu0
      %v1130 = vmax.f32 %v1098, 0.0
      %v1131 = vmax.f32 %v1101, 0.0
      %v1132 = vmax.f32 %v1104, 0.0
      %v1133 = vmax.f32 %v1107, 0.0
      %v1134 = vmax.f32 %v1110, 0.0
      %v1135 = vmax.f32 %v1113, 0.0
      %v1136 = vmax.f32 %v1116, 0.0
      %v1137 = vmax.f32 %v1119, 0.0
      %v1138 = vmax.f32 %v1122, 0.0
      %v1139 = vmax.f32 %v1125, 0.0
      %v1140 = vmax.f32 %v1128, 0.0
      %v1141 = vld [vmem:[%s3] sm:$0xff]
      %v1142 = vld [vmem:[%s3 + $0x8] sm:$0xff]
      %v1143 = vld [vmem:[%s3 + $0x10] sm:$0xff]
      %v1144 = vld [vmem:[%s3 + $0x18] sm:$0xff]
      %v1145 = vld [vmem:[%s3 + $0x20] sm:$0xff]
      %v1146 = vld [vmem:[%s3 + $0x28] sm:$0xff]
      %v1147 = vld [vmem:[%s3 + $0x30] sm:$0xff]
      %v1148 = vld [vmem:[%s3 + $0x38] sm:$0xff]
      %v1149 = vld [vmem:[%s3 + $0x40] sm:$0xff]
      %v1150 = vld [vmem:[%s3 + $0x48] sm:$0xff]
      %s1151 = scalar_lea.vmem %s3, 80
      %v1152 = vld [vmem:[%s1151] sm:$0xff]
      %v1153 = vld [vmem:[%s1151 + $0x8] sm:$0xff]
      %v1154 = vld [vmem:[%s1151 + $0x10] sm:$0xff]
      %v1155 = vld [vmem:[%s1151 + $0x18] sm:$0xff]
      %v1156 = vld [vmem:[%s1151 + $0x20] sm:$0xff]
      %v1157 = vld [vmem:[%s1151 + $0x28] sm:$0xff]
      %v1158 = vld [vmem:[%s1151 + $0x30] sm:$0xff]
      %v1159 = vld [vmem:[%s1151 + $0x38] sm:$0xff]
      %v1160 = vld [vmem:[%s1151 + $0x40] sm:$0xff]
      %v1161 = vld [vmem:[%s1151 + $0x48] sm:$0xff]
      %1173 = vrot.lane.b32.xlu0 %v1130, 127
      %v1174 = vpop.permute.xlu0 %1173
      %1175 = vrot.lane.b32.xlu0 %v1131, 127
      %v1176 = vpop.permute.xlu0 %1175
      %1177 = vrot.lane.b32.xlu0 %v1132, 127
      %v1178 = vpop.permute.xlu0 %1177
      %1179 = vrot.lane.b32.xlu0 %v1133, 127
      %v1180 = vpop.permute.xlu0 %1179
      %1181 = vrot.lane.b32.xlu0 %v1134, 127
      %v1182 = vpop.permute.xlu0 %1181
      %1183 = vrot.lane.b32.xlu0 %v1135, 127
      %v1184 = vpop.permute.xlu0 %1183
      %1185 = vrot.lane.b32.xlu0 %v1136, 127
      %v1186 = vpop.permute.xlu0 %1185
      %1187 = vrot.lane.b32.xlu0 %v1137, 127
      %v1188 = vpop.permute.xlu0 %1187
      %1189 = vrot.lane.b32.xlu0 %v1138, 127
      %v1190 = vpop.permute.xlu0 %1189
      %1191 = vrot.lane.b32.xlu0 %v1139, 127
      %v1192 = vpop.permute.xlu0 %1191
      %1193 = vrot.lane.b32.xlu0 %v1140, 127
      %v1194 = vpop.permute.xlu0 %1193
      %vm1205 = vcmask 687104
      %v1207 = vsel %vm1205, %v1152, 0
      %v1210 = vsel %vm1205, %v1153, 0
      %v1213 = vsel %vm1205, %v1154, 0
      %v1216 = vsel %vm1205, %v1155, 0
      %v1219 = vsel %vm1205, %v1156, 0
      %v1222 = vsel %vm1205, %v1157, 0
      %v1225 = vsel %vm1205, %v1158, 0
      %v1228 = vsel %vm1205, %v1159, 0
      %v1231 = vsel %vm1205, %v1160, 0
      %v1234 = vsel %vm1205, %v1161, 0
      %v1236 = vsel %vm1076, %v1194, 0
      %1238 = vmatpush.msra.mxu0 0.0
      %1239 = vmatpush.msra.mxu0 0.0
      %1240 = vmatpush.msra.mxu0 0.0
      %1241 = vmatpush.msra.mxu0 0.0
      %1242 = vmatpush.msra.mxu0 0.0
      %1243 = vmatpush.msra.mxu0 %v1236
      %1244 = vmatpush.msra.mxu0 %v1192
      %1245 = vmatpush.msra.mxu0 %v1190
      %1246 = vmatpush.msra.mxu0 %v1188
      %1247 = vmatpush.msra.mxu0 %v1186
      %1248 = vmatpush.msra.mxu0 %v1184
      %1249 = vmatpush.msra.mxu0 %v1182
      %1250 = vmatpush.msra.mxu0 %v1180
      %1251 = vmatpush.msra.mxu0 %v1178
      %1252 = vmatpush.msra.mxu0 %v1176
      %1253 = vmatpush.msra.mxu0 %v1174
      %1254 = vmatmul.f32.gmra.mxu0 %v1207
      %v1255 = vpop.f32.mrf.mxu0
      %v1256 = vadd.f32 0.0, %v1255
      %1257 = vmatmul.f32.gmra.mxu0 %v1210
      %v1258 = vpop.f32.mrf.mxu0
      %v1259 = vadd.f32 0.0, %v1258
      %1260 = vmatmul.f32.gmra.mxu0 %v1213
      %v1261 = vpop.f32.mrf.mxu0
      %v1262 = vadd.f32 0.0, %v1261
      %1263 = vmatmul.f32.gmra.mxu0 %v1216
      %v1264 = vpop.f32.mrf.mxu0
      %v1265 = vadd.f32 0.0, %v1264
      %1266 = vmatmul.f32.gmra.mxu0 %v1219
      %v1267 = vpop.f32.mrf.mxu0
      %v1268 = vadd.f32 0.0, %v1267
      %1269 = vmatmul.f32.gmra.mxu0 %v1222
      %v1270 = vpop.f32.mrf.mxu0
      %v1271 = vadd.f32 0.0, %v1270
      %1272 = vmatmul.f32.gmra.mxu0 %v1225
      %v1273 = vpop.f32.mrf.mxu0
      %v1274 = vadd.f32 0.0, %v1273
      %1275 = vmatmul.f32.gmra.mxu0 %v1228
      %v1276 = vpop.f32.mrf.mxu0
      %v1277 = vadd.f32 0.0, %v1276
      %1278 = vmatmul.f32.gmra.mxu0 %v1231
      %v1279 = vpop.f32.mrf.mxu0
      %v1280 = vadd.f32 0.0, %v1279
      %1281 = vmatmul.f32.gmra.mxu0 %v1234
      %v1282 = vpop.f32.mrf.mxu0
      %v1283 = vadd.f32 0.0, %v1282
      %1284 = vdwg.mxu0
      %v1286 = vsel %vm1205, %v1141, 0
      %v1289 = vsel %vm1205, %v1142, 0
      %v1292 = vsel %vm1205, %v1143, 0
      %v1295 = vsel %vm1205, %v1144, 0
      %v1298 = vsel %vm1205, %v1145, 0
      %v1301 = vsel %vm1205, %v1146, 0
      %v1304 = vsel %vm1205, %v1147, 0
      %v1307 = vsel %vm1205, %v1148, 0
      %v1310 = vsel %vm1205, %v1149, 0
      %v1313 = vsel %vm1205, %v1150, 0
      %v1315 = vsel %vm1076, %v1140, 0
      %1317 = vmatpush.msra.mxu0 0.0
      %1318 = vmatpush.msra.mxu0 0.0
      %1319 = vmatpush.msra.mxu0 0.0
      %1320 = vmatpush.msra.mxu0 0.0
      %1321 = vmatpush.msra.mxu0 0.0
      %1322 = vmatpush.msra.mxu0 %v1315
      %1323 = vmatpush.msra.mxu0 %v1139
      %1324 = vmatpush.msra.mxu0 %v1138
      %1325 = vmatpush.msra.mxu0 %v1137
      %1326 = vmatpush.msra.mxu0 %v1136
      %1327 = vmatpush.msra.mxu0 %v1135
      %1328 = vmatpush.msra.mxu0 %v1134
      %1329 = vmatpush.msra.mxu0 %v1133
      %1330 = vmatpush.msra.mxu0 %v1132
      %1331 = vmatpush.msra.mxu0 %v1131
      %1332 = vmatpush.msra.mxu0 %v1130
      %1333 = vmatmul.f32.gmra.mxu0 %v1286
      %v1334 = vpop.f32.mrf.mxu0
      %v1335 = vadd.f32 %v1256, %v1334
      %1336 = vmatmul.f32.gmra.mxu0 %v1289
      %v1337 = vpop.f32.mrf.mxu0
      %v1338 = vadd.f32 %v1259, %v1337
      %1339 = vmatmul.f32.gmra.mxu0 %v1292
      %v1340 = vpop.f32.mrf.mxu0
      %v1341 = vadd.f32 %v1262, %v1340
      %1342 = vmatmul.f32.gmra.mxu0 %v1295
      %v1343 = vpop.f32.mrf.mxu0
      %v1344 = vadd.f32 %v1265, %v1343
      %1345 = vmatmul.f32.gmra.mxu0 %v1298
      %v1346 = vpop.f32.mrf.mxu0
      %v1347 = vadd.f32 %v1268, %v1346
      %1348 = vmatmul.f32.gmra.mxu0 %v1301
      %v1349 = vpop.f32.mrf.mxu0
      %v1350 = vadd.f32 %v1271, %v1349
      %1351 = vmatmul.f32.gmra.mxu0 %v1304
      %v1352 = vpop.f32.mrf.mxu0
      %v1353 = vadd.f32 %v1274, %v1352
      %1354 = vmatmul.f32.gmra.mxu0 %v1307
      %v1355 = vpop.f32.mrf.mxu0
      %v1356 = vadd.f32 %v1277, %v1355
      %1357 = vmatmul.f32.gmra.mxu0 %v1310
      %v1358 = vpop.f32.mrf.mxu0
      %v1359 = vadd.f32 %v1280, %v1358
      %1360 = vmatmul.f32.gmra.mxu0 %v1313
      %v1361 = vpop.f32.mrf.mxu0
      %v1362 = vadd.f32 %v1283, %v1361
      %1363 = vdwg.mxu0
      %s1364 = scalar_lea.vmem %s3, 160
      %v1365 = vld [vmem:[%s1364] sm:$0xff]
      %v1366 = vld [vmem:[%s1364 + $0x8] sm:$0xff]
      %v1367 = vld [vmem:[%s1364 + $0x10] sm:$0xff]
      %v1368 = vld [vmem:[%s1364 + $0x18] sm:$0xff]
      %v1369 = vld [vmem:[%s1364 + $0x20] sm:$0xff]
      %v1370 = vld [vmem:[%s1364 + $0x28] sm:$0xff]
      %v1371 = vld [vmem:[%s1364 + $0x30] sm:$0xff]
      %v1372 = vld [vmem:[%s1364 + $0x38] sm:$0xff]
      %v1373 = vld [vmem:[%s1364 + $0x40] sm:$0xff]
      %v1374 = vld [vmem:[%s1364 + $0x48] sm:$0xff]
      %1375 = vrot.lane.b32.xlu0 %v1130, 126
      %v1376 = vpop.permute.xlu0 %1375
      %1377 = vrot.lane.b32.xlu0 %v1131, 126
      %v1378 = vpop.permute.xlu0 %1377
      %1379 = vrot.lane.b32.xlu0 %v1132, 126
      %v1380 = vpop.permute.xlu0 %1379
      %1381 = vrot.lane.b32.xlu0 %v1133, 126
      %v1382 = vpop.permute.xlu0 %1381
      %1383 = vrot.lane.b32.xlu0 %v1134, 126
      %v1384 = vpop.permute.xlu0 %1383
      %1385 = vrot.lane.b32.xlu0 %v1135, 126
      %v1386 = vpop.permute.xlu0 %1385
      %1387 = vrot.lane.b32.xlu0 %v1136, 126
      %v1388 = vpop.permute.xlu0 %1387
      %1389 = vrot.lane.b32.xlu0 %v1137, 126
      %v1390 = vpop.permute.xlu0 %1389
      %1391 = vrot.lane.b32.xlu0 %v1138, 126
      %v1392 = vpop.permute.xlu0 %1391
      %1393 = vrot.lane.b32.xlu0 %v1139, 126
      %v1394 = vpop.permute.xlu0 %1393
      %1395 = vrot.lane.b32.xlu0 %v1140, 126
      %v1396 = vpop.permute.xlu0 %1395
      %v1408 = vsel %vm1205, %v1365, 0
      %v1411 = vsel %vm1205, %v1366, 0
      %v1414 = vsel %vm1205, %v1367, 0
      %v1417 = vsel %vm1205, %v1368, 0
      %v1420 = vsel %vm1205, %v1369, 0
      %v1423 = vsel %vm1205, %v1370, 0
      %v1426 = vsel %vm1205, %v1371, 0
      %v1429 = vsel %vm1205, %v1372, 0
      %v1432 = vsel %vm1205, %v1373, 0
      %v1435 = vsel %vm1205, %v1374, 0
      %v1437 = vsel %vm1076, %v1396, 0
      %1439 = vmatpush.msra.mxu0 0.0
      %1440 = vmatpush.msra.mxu0 0.0
      %1441 = vmatpush.msra.mxu0 0.0
      %1442 = vmatpush.msra.mxu0 0.0
      %1443 = vmatpush.msra.mxu0 0.0
      %1444 = vmatpush.msra.mxu0 %v1437
      %1445 = vmatpush.msra.mxu0 %v1394
      %1446 = vmatpush.msra.mxu0 %v1392
      %1447 = vmatpush.msra.mxu0 %v1390
      %1448 = vmatpush.msra.mxu0 %v1388
      %1449 = vmatpush.msra.mxu0 %v1386
      %1450 = vmatpush.msra.mxu0 %v1384
      %1451 = vmatpush.msra.mxu0 %v1382
      %1452 = vmatpush.msra.mxu0 %v1380
      %1453 = vmatpush.msra.mxu0 %v1378
      %1454 = vmatpush.msra.mxu0 %v1376
      %1455 = vmatmul.f32.gmra.mxu0 %v1408
      %v1456 = vpop.f32.mrf.mxu0
      %v1457 = vadd.f32 0.0, %v1456
      %1458 = vmatmul.f32.gmra.mxu0 %v1411
      %v1459 = vpop.f32.mrf.mxu0
      %v1460 = vadd.f32 0.0, %v1459
      %1461 = vmatmul.f32.gmra.mxu0 %v1414
      %v1462 = vpop.f32.mrf.mxu0
      %v1463 = vadd.f32 0.0, %v1462
      %1464 = vmatmul.f32.gmra.mxu0 %v1417
      %v1465 = vpop.f32.mrf.mxu0
      %v1466 = vadd.f32 0.0, %v1465
      %1467 = vmatmul.f32.gmra.mxu0 %v1420
      %v1468 = vpop.f32.mrf.mxu0
      %v1469 = vadd.f32 0.0, %v1468
      %1470 = vmatmul.f32.gmra.mxu0 %v1423
      %v1471 = vpop.f32.mrf.mxu0
      %v1472 = vadd.f32 0.0, %v1471
      %1473 = vmatmul.f32.gmra.mxu0 %v1426
      %v1474 = vpop.f32.mrf.mxu0
      %v1475 = vadd.f32 0.0, %v1474
      %1476 = vmatmul.f32.gmra.mxu0 %v1429
      %v1477 = vpop.f32.mrf.mxu0
      %v1478 = vadd.f32 0.0, %v1477
      %1479 = vmatmul.f32.gmra.mxu0 %v1432
      %v1480 = vpop.f32.mrf.mxu0
      %v1481 = vadd.f32 0.0, %v1480
      %1482 = vmatmul.f32.gmra.mxu0 %v1435
      %v1483 = vpop.f32.mrf.mxu0
      %v1484 = vadd.f32 0.0, %v1483
      %1485 = vdwg.mxu0
      %v1486 = vadd.f32 %v1335, %v1457
      %v1487 = vadd.f32 %v1338, %v1460
      %v1488 = vadd.f32 %v1341, %v1463
      %v1489 = vadd.f32 %v1344, %v1466
      %v1490 = vadd.f32 %v1347, %v1469
      %v1491 = vadd.f32 %v1350, %v1472
      %v1492 = vadd.f32 %v1353, %v1475
      %v1493 = vadd.f32 %v1356, %v1478
      %v1494 = vadd.f32 %v1359, %v1481
      %v1495 = vadd.f32 %v1362, %v1484
      %s1496 = scalar_lea.vmem %s3, 240
      %v1497 = vld [vmem:[%s1496] sm:$0xff]
      %v1498 = vld [vmem:[%s1496 + $0x8] sm:$0xff]
      %v1499 = vld [vmem:[%s1496 + $0x10] sm:$0xff]
      %v1500 = vld [vmem:[%s1496 + $0x18] sm:$0xff]
      %v1501 = vld [vmem:[%s1496 + $0x20] sm:$0xff]
      %v1502 = vld [vmem:[%s1496 + $0x28] sm:$0xff]
      %v1503 = vld [vmem:[%s1496 + $0x30] sm:$0xff]
      %v1504 = vld [vmem:[%s1496 + $0x38] sm:$0xff]
      %v1505 = vld [vmem:[%s1496 + $0x40] sm:$0xff]
      %v1506 = vld [vmem:[%s1496 + $0x48] sm:$0xff]
      %1507 = vrot.lane.b32.xlu0 %v1130, 125
      %v1508 = vpop.permute.xlu0 %1507
      %1509 = vrot.lane.b32.xlu0 %v1131, 125
      %v1510 = vpop.permute.xlu0 %1509
      %1511 = vrot.lane.b32.xlu0 %v1132, 125
      %v1512 = vpop.permute.xlu0 %1511
      %1513 = vrot.lane.b32.xlu0 %v1133, 125
      %v1514 = vpop.permute.xlu0 %1513
      %1515 = vrot.lane.b32.xlu0 %v1134, 125
      %v1516 = vpop.permute.xlu0 %1515
      %1517 = vrot.lane.b32.xlu0 %v1135, 125
      %v1518 = vpop.permute.xlu0 %1517
      %1519 = vrot.lane.b32.xlu0 %v1136, 125
      %v1520 = vpop.permute.xlu0 %1519
      %1521 = vrot.lane.b32.xlu0 %v1137, 125
      %v1522 = vpop.permute.xlu0 %1521
      %1523 = vrot.lane.b32.xlu0 %v1138, 125
      %v1524 = vpop.permute.xlu0 %1523
      %1525 = vrot.lane.b32.xlu0 %v1139, 125
      %v1526 = vpop.permute.xlu0 %1525
      %1527 = vrot.lane.b32.xlu0 %v1140, 125
      %v1528 = vpop.permute.xlu0 %1527
      %v1540 = vsel %vm1205, %v1497, 0
      %v1543 = vsel %vm1205, %v1498, 0
      %v1546 = vsel %vm1205, %v1499, 0
      %v1549 = vsel %vm1205, %v1500, 0
      %v1552 = vsel %vm1205, %v1501, 0
      %v1555 = vsel %vm1205, %v1502, 0
      %v1558 = vsel %vm1205, %v1503, 0
      %v1561 = vsel %vm1205, %v1504, 0
      %v1564 = vsel %vm1205, %v1505, 0
      %v1567 = vsel %vm1205, %v1506, 0
      %v1569 = vsel %vm1076, %v1528, 0
      %1571 = vmatpush.msra.mxu0 0.0
      %1572 = vmatpush.msra.mxu0 0.0
      %1573 = vmatpush.msra.mxu0 0.0
      %1574 = vmatpush.msra.mxu0 0.0
      %1575 = vmatpush.msra.mxu0 0.0
      %1576 = vmatpush.msra.mxu0 %v1569
      %1577 = vmatpush.msra.mxu0 %v1526
      %1578 = vmatpush.msra.mxu0 %v1524
      %1579 = vmatpush.msra.mxu0 %v1522
      %1580 = vmatpush.msra.mxu0 %v1520
      %1581 = vmatpush.msra.mxu0 %v1518
      %1582 = vmatpush.msra.mxu0 %v1516
      %1583 = vmatpush.msra.mxu0 %v1514
      %1584 = vmatpush.msra.mxu0 %v1512
      %1585 = vmatpush.msra.mxu0 %v1510
      %1586 = vmatpush.msra.mxu0 %v1508
      %1587 = vmatmul.f32.gmra.mxu0 %v1540
      %v1588 = vpop.f32.mrf.mxu0
      %v1589 = vadd.f32 0.0, %v1588
      %1590 = vmatmul.f32.gmra.mxu0 %v1543
      %v1591 = vpop.f32.mrf.mxu0
      %v1592 = vadd.f32 0.0, %v1591
      %1593 = vmatmul.f32.gmra.mxu0 %v1546
      %v1594 = vpop.f32.mrf.mxu0
      %v1595 = vadd.f32 0.0, %v1594
      %1596 = vmatmul.f32.gmra.mxu0 %v1549
      %v1597 = vpop.f32.mrf.mxu0
      %v1598 = vadd.f32 0.0, %v1597
      %1599 = vmatmul.f32.gmra.mxu0 %v1552
      %v1600 = vpop.f32.mrf.mxu0
      %v1601 = vadd.f32 0.0, %v1600
      %1602 = vmatmul.f32.gmra.mxu0 %v1555
      %v1603 = vpop.f32.mrf.mxu0
      %v1604 = vadd.f32 0.0, %v1603
      %1605 = vmatmul.f32.gmra.mxu0 %v1558
      %v1606 = vpop.f32.mrf.mxu0
      %v1607 = vadd.f32 0.0, %v1606
      %1608 = vmatmul.f32.gmra.mxu0 %v1561
      %v1609 = vpop.f32.mrf.mxu0
      %v1610 = vadd.f32 0.0, %v1609
      %1611 = vmatmul.f32.gmra.mxu0 %v1564
      %v1612 = vpop.f32.mrf.mxu0
      %v1613 = vadd.f32 0.0, %v1612
      %1614 = vmatmul.f32.gmra.mxu0 %v1567
      %v1615 = vpop.f32.mrf.mxu0
      %v1616 = vadd.f32 0.0, %v1615
      %1617 = vdwg.mxu0
      %v1618 = vadd.f32 %v1486, %v1589
      %v1619 = vadd.f32 %v1487, %v1592
      %v1620 = vadd.f32 %v1488, %v1595
      %v1621 = vadd.f32 %v1489, %v1598
      %v1622 = vadd.f32 %v1490, %v1601
      %v1623 = vadd.f32 %v1491, %v1604
      %v1624 = vadd.f32 %v1492, %v1607
      %v1625 = vadd.f32 %v1493, %v1610
      %v1626 = vadd.f32 %v1494, %v1613
      %v1627 = vadd.f32 %v1495, %v1616
      %s1628 = scalar_lea.vmem %s3, 320
      %v1629 = vld [vmem:[%s1628] sm:$0xff]
      %v1630 = vld [vmem:[%s1628 + $0x8] sm:$0xff]
      %v1631 = vld [vmem:[%s1628 + $0x10] sm:$0xff]
      %v1632 = vld [vmem:[%s1628 + $0x18] sm:$0xff]
      %v1633 = vld [vmem:[%s1628 + $0x20] sm:$0xff]
      %v1634 = vld [vmem:[%s1628 + $0x28] sm:$0xff]
      %v1635 = vld [vmem:[%s1628 + $0x30] sm:$0xff]
      %v1636 = vld [vmem:[%s1628 + $0x38] sm:$0xff]
      %v1637 = vld [vmem:[%s1628 + $0x40] sm:$0xff]
      %v1638 = vld [vmem:[%s1628 + $0x48] sm:$0xff]
      %1639 = vrot.lane.b32.xlu0 %v1130, 124
      %v1640 = vpop.permute.xlu0 %1639
      %1641 = vrot.lane.b32.xlu0 %v1131, 124
      %v1642 = vpop.permute.xlu0 %1641
      %1643 = vrot.lane.b32.xlu0 %v1132, 124
      %v1644 = vpop.permute.xlu0 %1643
      %1645 = vrot.lane.b32.xlu0 %v1133, 124
      %v1646 = vpop.permute.xlu0 %1645
      %1647 = vrot.lane.b32.xlu0 %v1134, 124
      %v1648 = vpop.permute.xlu0 %1647
      %1649 = vrot.lane.b32.xlu0 %v1135, 124
      %v1650 = vpop.permute.xlu0 %1649
      %1651 = vrot.lane.b32.xlu0 %v1136, 124
      %v1652 = vpop.permute.xlu0 %1651
      %1653 = vrot.lane.b32.xlu0 %v1137, 124
      %v1654 = vpop.permute.xlu0 %1653
      %1655 = vrot.lane.b32.xlu0 %v1138, 124
      %v1656 = vpop.permute.xlu0 %1655
      %1657 = vrot.lane.b32.xlu0 %v1139, 124
      %v1658 = vpop.permute.xlu0 %1657
      %1659 = vrot.lane.b32.xlu0 %v1140, 124
      %v1660 = vpop.permute.xlu0 %1659
      %v1672 = vsel %vm1205, %v1629, 0
      %v1675 = vsel %vm1205, %v1630, 0
      %v1678 = vsel %vm1205, %v1631, 0
      %v1681 = vsel %vm1205, %v1632, 0
      %v1684 = vsel %vm1205, %v1633, 0
      %v1687 = vsel %vm1205, %v1634, 0
      %v1690 = vsel %vm1205, %v1635, 0
      %v1693 = vsel %vm1205, %v1636, 0
      %v1696 = vsel %vm1205, %v1637, 0
      %v1699 = vsel %vm1205, %v1638, 0
      %v1701 = vsel %vm1076, %v1660, 0
      %1703 = vmatpush.msra.mxu0 0.0
      %1704 = vmatpush.msra.mxu0 0.0
      %1705 = vmatpush.msra.mxu0 0.0
      %1706 = vmatpush.msra.mxu0 0.0
      %1707 = vmatpush.msra.mxu0 0.0
      %1708 = vmatpush.msra.mxu0 %v1701
      %1709 = vmatpush.msra.mxu0 %v1658
      %1710 = vmatpush.msra.mxu0 %v1656
      %1711 = vmatpush.msra.mxu0 %v1654
      %1712 = vmatpush.msra.mxu0 %v1652
      %1713 = vmatpush.msra.mxu0 %v1650
      %1714 = vmatpush.msra.mxu0 %v1648
      %1715 = vmatpush.msra.mxu0 %v1646
      %1716 = vmatpush.msra.mxu0 %v1644
      %1717 = vmatpush.msra.mxu0 %v1642
      %1718 = vmatpush.msra.mxu0 %v1640
      %1719 = vmatmul.f32.gmra.mxu0 %v1672
      %v1720 = vpop.f32.mrf.mxu0
      %v1721 = vadd.f32 0.0, %v1720
      %1722 = vmatmul.f32.gmra.mxu0 %v1675
      %v1723 = vpop.f32.mrf.mxu0
      %v1724 = vadd.f32 0.0, %v1723
      %1725 = vmatmul.f32.gmra.mxu0 %v1678
      %v1726 = vpop.f32.mrf.mxu0
      %v1727 = vadd.f32 0.0, %v1726
      %1728 = vmatmul.f32.gmra.mxu0 %v1681
      %v1729 = vpop.f32.mrf.mxu0
      %v1730 = vadd.f32 0.0, %v1729
      %1731 = vmatmul.f32.gmra.mxu0 %v1684
      %v1732 = vpop.f32.mrf.mxu0
      %v1733 = vadd.f32 0.0, %v1732
      %1734 = vmatmul.f32.gmra.mxu0 %v1687
      %v1735 = vpop.f32.mrf.mxu0
      %v1736 = vadd.f32 0.0, %v1735
      %1737 = vmatmul.f32.gmra.mxu0 %v1690
      %v1738 = vpop.f32.mrf.mxu0
      %v1739 = vadd.f32 0.0, %v1738
      %1740 = vmatmul.f32.gmra.mxu0 %v1693
      %v1741 = vpop.f32.mrf.mxu0
      %v1742 = vadd.f32 0.0, %v1741
      %1743 = vmatmul.f32.gmra.mxu0 %v1696
      %v1744 = vpop.f32.mrf.mxu0
      %v1745 = vadd.f32 0.0, %v1744
      %1746 = vmatmul.f32.gmra.mxu0 %v1699
      %v1747 = vpop.f32.mrf.mxu0
      %v1748 = vadd.f32 0.0, %v1747
      %1749 = vdwg.mxu0
      %v1750 = vadd.f32 %v1618, %v1721
      %v1751 = vadd.f32 %v1619, %v1724
      %v1752 = vadd.f32 %v1620, %v1727
      %v1753 = vadd.f32 %v1621, %v1730
      %v1754 = vadd.f32 %v1622, %v1733
      %v1755 = vadd.f32 %v1623, %v1736
      %v1756 = vadd.f32 %v1624, %v1739
      %v1757 = vadd.f32 %v1625, %v1742
      %v1758 = vadd.f32 %v1626, %v1745
      %v1759 = vadd.f32 %v1627, %v1748
      %v1760 = vld [vmem:[%s4] sm:$0xff]
      %v1761 = vld [vmem:[%s4 + $0x8] sm:$0xff]
      %v1762 = vld [vmem:[%s4 + $0x10] sm:$0xff]
      %v1763 = vld [vmem:[%s4 + $0x18] sm:$0xff]
      %v1764 = vld [vmem:[%s4 + $0x20] sm:$0xff]
      %v1765 = vld [vmem:[%s4 + $0x28] sm:$0xff]
      %v1766 = vld [vmem:[%s4 + $0x30] sm:$0xff]
      %v1767 = vld [vmem:[%s4 + $0x38] sm:$0xff]
      %v1768 = vld [vmem:[%s4 + $0x40] sm:$0xff]
      %v1769 = vld [vmem:[%s4 + $0x48] sm:$0xff]
      %1771 = vset.pattern.permute.xlu0 0
      %1772 = vperm.xlu0 %1771, %v1760
      %v1773 = vpop.permute.xlu0 %1772
      %1776 = vset.pattern.permute.xlu0 0
      %1777 = vperm.xlu0 %1776, %v1761
      %v1778 = vpop.permute.xlu0 %1777
      %1781 = vset.pattern.permute.xlu0 0
      %1782 = vperm.xlu0 %1781, %v1762
      %v1783 = vpop.permute.xlu0 %1782
      %1786 = vset.pattern.permute.xlu0 0
      %1787 = vperm.xlu0 %1786, %v1763
      %v1788 = vpop.permute.xlu0 %1787
      %1791 = vset.pattern.permute.xlu0 0
      %1792 = vperm.xlu0 %1791, %v1764
      %v1793 = vpop.permute.xlu0 %1792
      %1796 = vset.pattern.permute.xlu0 0
      %1797 = vperm.xlu0 %1796, %v1765
      %v1798 = vpop.permute.xlu0 %1797
      %1801 = vset.pattern.permute.xlu0 0
      %1802 = vperm.xlu0 %1801, %v1766
      %v1803 = vpop.permute.xlu0 %1802
      %1806 = vset.pattern.permute.xlu0 0
      %1807 = vperm.xlu0 %1806, %v1767
      %v1808 = vpop.permute.xlu0 %1807
      %1811 = vset.pattern.permute.xlu0 0
      %1812 = vperm.xlu0 %1811, %v1768
      %v1813 = vpop.permute.xlu0 %1812
      %1816 = vset.pattern.permute.xlu0 0
      %1817 = vperm.xlu0 %1816, %v1769
      %v1818 = vpop.permute.xlu0 %1817
      %vm1820 = vcmask 80896
      %v1822 = vsel %vm1820, %v1750, 0
      %v1825 = vsel %vm1820, %v1751, 0
      %v1828 = vsel %vm1820, %v1752, 0
      %v1831 = vsel %vm1820, %v1753, 0
      %v1834 = vsel %vm1820, %v1754, 0
      %v1837 = vsel %vm1820, %v1755, 0
      %v1840 = vsel %vm1820, %v1756, 0
      %v1843 = vsel %vm1820, %v1757, 0
      %v1846 = vsel %vm1820, %v1758, 0
      %v1849 = vsel %vm1820, %v1759, 0
      %vm1851 = vcmask 1041408
      %v1853 = vsel %vm1851, %v973, 0
      %1855 = vmatpush.msra.mxu0 0.0
      %1856 = vmatpush.msra.mxu0 0.0
      %1857 = vmatpush.msra.mxu0 0.0
      %1858 = vmatpush.msra.mxu0 0.0
      %1859 = vmatpush.msra.mxu0 0.0
      %1860 = vmatpush.msra.mxu0 0.0
      %1861 = vmatpush.msra.mxu0 0.0
      %1862 = vmatpush.msra.mxu0 0.0
      %1863 = vmatpush.msra.mxu0 0.0
      %1864 = vmatpush.msra.mxu0 0.0
      %1865 = vmatpush.msra.mxu0 0.0
      %1866 = vmatpush.msra.mxu0 0.0
      %1867 = vmatpush.msra.mxu0 0.0
      %1868 = vmatpush.msra.mxu0 0.0
      %1869 = vmatpush.msra.mxu0 %v1853
      %1870 = vmatpush.msra.mxu0 %v972
      %1871 = vmatmul.f32.gmra.mxu0 %v1822
      %v1872 = vpop.f32.mrf.mxu0
      %v1873 = vadd.f32 %v1773, %v1872
      %1874 = vmatmul.f32.gmra.mxu0 %v1825
      %v1875 = vpop.f32.mrf.mxu0
      %v1876 = vadd.f32 %v1778, %v1875
      %1877 = vmatmul.f32.gmra.mxu0 %v1828
      %v1878 = vpop.f32.mrf.mxu0
      %v1879 = vadd.f32 %v1783, %v1878
      %1880 = vmatmul.f32.gmra.mxu0 %v1831
      %v1881 = vpop.f32.mrf.mxu0
      %v1882 = vadd.f32 %v1788, %v1881
      %1883 = vmatmul.f32.gmra.mxu0 %v1834
      %v1884 = vpop.f32.mrf.mxu0
      %v1885 = vadd.f32 %v1793, %v1884
      %1886 = vmatmul.f32.gmra.mxu0 %v1837
      %v1887 = vpop.f32.mrf.mxu0
      %v1888 = vadd.f32 %v1798, %v1887
      %1889 = vmatmul.f32.gmra.mxu0 %v1840
      %v1890 = vpop.f32.mrf.mxu0
      %v1891 = vadd.f32 %v1803, %v1890
      %1892 = vmatmul.f32.gmra.mxu0 %v1843
      %v1893 = vpop.f32.mrf.mxu0
      %v1894 = vadd.f32 %v1808, %v1893
      %1895 = vmatmul.f32.gmra.mxu0 %v1846
      %v1896 = vpop.f32.mrf.mxu0
      %v1897 = vadd.f32 %v1813, %v1896
      %1898 = vmatmul.f32.gmra.mxu0 %v1849
      %v1899 = vpop.f32.mrf.mxu0
      %v1900 = vadd.f32 %v1818, %v1899
      %1901 = vdwg.mxu0
      %v1902 = vmax.f32 %v1873, 0.0
      %v1903 = vmax.f32 %v1876, 0.0
      %v1904 = vmax.f32 %v1879, 0.0
      %v1905 = vmax.f32 %v1882, 0.0
      %v1906 = vmax.f32 %v1885, 0.0
      %v1907 = vmax.f32 %v1888, 0.0
      %v1908 = vmax.f32 %v1891, 0.0
      %v1909 = vmax.f32 %v1894, 0.0
      %v1910 = vmax.f32 %v1897, 0.0
      %v1911 = vmax.f32 %v1900, 0.0
      %v1912 = vld [vmem:[%s6] sm:$0xff]
      %v1913 = vld [vmem:[%s6 + $0x8] sm:$0xff]
      %v1914 = vld [vmem:[%s6 + $0x10] sm:$0xff]
      %v1915 = vld [vmem:[%s6 + $0x18] sm:$0xff]
      %v1916 = vld [vmem:[%s6 + $0x20] sm:$0xff]
      %v1917 = vld [vmem:[%s6 + $0x28] sm:$0xff]
      %v1918 = vld [vmem:[%s6 + $0x30] sm:$0xff]
      %v1919 = vld [vmem:[%s6 + $0x38] sm:$0xff]
      %v1920 = vld [vmem:[%s6 + $0x40] sm:$0xff]
      %v1921 = vld [vmem:[%s6 + $0x48] sm:$0xff]
      %v1922 = vld [vmem:[%s6 + $0x50] sm:$0xff]
      %v1923 = vld [vmem:[%s6 + $0x58] sm:$0xff]
      %v1924 = vld [vmem:[%s6 + $0x60] sm:$0xff]
      %v1925 = vld [vmem:[%s6 + $0x68] sm:$0xff]
      %v1926 = vld [vmem:[%s6 + $0x70] sm:$0xff]
      %v1927 = vld [vmem:[%s5] sm:$0xff]
      %v1928 = vld [vmem:[%s5 + $0x8] sm:$0xff]
      %v1929 = vld [vmem:[%s5 + $0x10] sm:$0xff]
      %v1930 = vld [vmem:[%s5 + $0x18] sm:$0xff]
      %v1931 = vld [vmem:[%s5 + $0x20] sm:$0xff]
      %v1932 = vld [vmem:[%s5 + $0x28] sm:$0xff]
      %v1933 = vld [vmem:[%s5 + $0x30] sm:$0xff]
      %v1934 = vld [vmem:[%s5 + $0x38] sm:$0xff]
      %v1935 = vld [vmem:[%s5 + $0x40] sm:$0xff]
      %v1936 = vld [vmem:[%s5 + $0x48] sm:$0xff]
      %v1937 = vld [vmem:[%s5 + $0x50] sm:$0xff]
      %v1938 = vld [vmem:[%s5 + $0x58] sm:$0xff]
      %v1939 = vld [vmem:[%s5 + $0x60] sm:$0xff]
      %v1940 = vld [vmem:[%s5 + $0x68] sm:$0xff]
      %v1941 = vld [vmem:[%s5 + $0x70] sm:$0xff]
      %vm1942 = vcmask 654336
      %v1944 = vsel %vm1942, %v1927, 0
      %v1947 = vsel %vm1942, %v1928, 0
      %v1950 = vsel %vm1942, %v1929, 0
      %v1953 = vsel %vm1942, %v1930, 0
      %v1956 = vsel %vm1942, %v1931, 0
      %v1959 = vsel %vm1942, %v1932, 0
      %v1962 = vsel %vm1942, %v1933, 0
      %v1965 = vsel %vm1942, %v1934, 0
      %v1968 = vsel %vm1942, %v1935, 0
      %v1971 = vsel %vm1942, %v1936, 0
      %v1974 = vsel %vm1942, %v1937, 0
      %v1977 = vsel %vm1942, %v1938, 0
      %v1980 = vsel %vm1942, %v1939, 0
      %v1983 = vsel %vm1942, %v1940, 0
      %v1986 = vsel %vm1942, %v1941, 0
      %1988 = vmatpush.msra.mxu0 0.0
      %1989 = vmatpush.msra.mxu0 0.0
      %1990 = vmatpush.msra.mxu0 0.0
      %1991 = vmatpush.msra.mxu0 0.0
      %1992 = vmatpush.msra.mxu0 0.0
      %1993 = vmatpush.msra.mxu0 0.0
      %1994 = vmatpush.msra.mxu0 %v1911
      %1995 = vmatpush.msra.mxu0 %v1910
      %1996 = vmatpush.msra.mxu0 %v1909
      %1997 = vmatpush.msra.mxu0 %v1908
      %1998 = vmatpush.msra.mxu0 %v1907
      %1999 = vmatpush.msra.mxu0 %v1906
      %2000 = vmatpush.msra.mxu0 %v1905
      %2001 = vmatpush.msra.mxu0 %v1904
      %2002 = vmatpush.msra.mxu0 %v1903
      %2003 = vmatpush.msra.mxu0 %v1902
      %2004 = vmatmul.f32.gmra.mxu0 %v1944
      %v2005 = vpop.f32.mrf.mxu0
      %v2006 = vadd.f32 0.0, %v2005
      %2007 = vmatmul.f32.gmra.mxu0 %v1947
      %v2008 = vpop.f32.mrf.mxu0
      %v2009 = vadd.f32 0.0, %v2008
      %2010 = vmatmul.f32.gmra.mxu0 %v1950
      %v2011 = vpop.f32.mrf.mxu0
      %v2012 = vadd.f32 0.0, %v2011
      %2013 = vmatmul.f32.gmra.mxu0 %v1953
      %v2014 = vpop.f32.mrf.mxu0
      %v2015 = vadd.f32 0.0, %v2014
      %2016 = vmatmul.f32.gmra.mxu0 %v1956
      %v2017 = vpop.f32.mrf.mxu0
      %v2018 = vadd.f32 0.0, %v2017
      %2019 = vmatmul.f32.gmra.mxu0 %v1959
      %v2020 = vpop.f32.mrf.mxu0
      %v2021 = vadd.f32 0.0, %v2020
      %2022 = vmatmul.f32.gmra.mxu0 %v1962
      %v2023 = vpop.f32.mrf.mxu0
      %v2024 = vadd.f32 0.0, %v2023
      %2025 = vmatmul.f32.gmra.mxu0 %v1965
      %v2026 = vpop.f32.mrf.mxu0
      %v2027 = vadd.f32 0.0, %v2026
      %2028 = vmatmul.f32.gmra.mxu0 %v1968
      %v2029 = vpop.f32.mrf.mxu0
      %v2030 = vadd.f32 0.0, %v2029
      %2031 = vmatmul.f32.gmra.mxu0 %v1971
      %v2032 = vpop.f32.mrf.mxu0
      %v2033 = vadd.f32 0.0, %v2032
      %2034 = vmatmul.f32.gmra.mxu0 %v1974
      %v2035 = vpop.f32.mrf.mxu0
      %v2036 = vadd.f32 0.0, %v2035
      %2037 = vmatmul.f32.gmra.mxu0 %v1977
      %v2038 = vpop.f32.mrf.mxu0
      %v2039 = vadd.f32 0.0, %v2038
      %2040 = vmatmul.f32.gmra.mxu0 %v1980
      %v2041 = vpop.f32.mrf.mxu0
      %v2042 = vadd.f32 0.0, %v2041
      %2043 = vmatmul.f32.gmra.mxu0 %v1983
      %v2044 = vpop.f32.mrf.mxu0
      %v2045 = vadd.f32 0.0, %v2044
      %2046 = vmatmul.f32.gmra.mxu0 %v1986
      %v2047 = vpop.f32.mrf.mxu0
      %v2048 = vadd.f32 0.0, %v2047
      %2049 = vdwg.mxu0
      %v2050 = vadd.f32 %v1912, %v2006
      %v2051 = vadd.f32 %v1913, %v2009
      %v2052 = vadd.f32 %v1914, %v2012
      %v2053 = vadd.f32 %v1915, %v2015
      %v2054 = vadd.f32 %v1916, %v2018
      %v2055 = vadd.f32 %v1917, %v2021
      %v2056 = vadd.f32 %v1918, %v2024
      %v2057 = vadd.f32 %v1919, %v2027
      %v2058 = vadd.f32 %v1920, %v2030
      %v2059 = vadd.f32 %v1921, %v2033
      %v2060 = vadd.f32 %v1922, %v2036
      %v2061 = vadd.f32 %v1923, %v2039
      %v2062 = vadd.f32 %v1924, %v2042
      %v2063 = vadd.f32 %v1925, %v2045
      %v2064 = vadd.f32 %v1926, %v2048
      %s2065 = scalar_lea.vmem %s5, 120
      %v2066 = vld [vmem:[%s2065] sm:$0xff]
      %v2067 = vld [vmem:[%s2065 + $0x8] sm:$0xff]
      %v2068 = vld [vmem:[%s2065 + $0x10] sm:$0xff]
      %v2069 = vld [vmem:[%s2065 + $0x18] sm:$0xff]
      %v2070 = vld [vmem:[%s2065 + $0x20] sm:$0xff]
      %v2071 = vld [vmem:[%s2065 + $0x28] sm:$0xff]
      %v2072 = vld [vmem:[%s2065 + $0x30] sm:$0xff]
      %v2073 = vld [vmem:[%s2065 + $0x38] sm:$0xff]
      %v2074 = vld [vmem:[%s2065 + $0x40] sm:$0xff]
      %v2075 = vld [vmem:[%s2065 + $0x48] sm:$0xff]
      %v2076 = vld [vmem:[%s2065 + $0x50] sm:$0xff]
      %v2077 = vld [vmem:[%s2065 + $0x58] sm:$0xff]
      %v2078 = vld [vmem:[%s2065 + $0x60] sm:$0xff]
      %v2079 = vld [vmem:[%s2065 + $0x68] sm:$0xff]
      %v2080 = vld [vmem:[%s2065 + $0x70] sm:$0xff]
      %2091 = vrot.lane.b32.xlu0 %v1902, 127
      %v2092 = vpop.permute.xlu0 %2091
      %2093 = vrot.lane.b32.xlu0 %v1903, 127
      %v2094 = vpop.permute.xlu0 %2093
      %2095 = vrot.lane.b32.xlu0 %v1904, 127
      %v2096 = vpop.permute.xlu0 %2095
      %2097 = vrot.lane.b32.xlu0 %v1905, 127
      %v2098 = vpop.permute.xlu0 %2097
      %2099 = vrot.lane.b32.xlu0 %v1906, 127
      %v2100 = vpop.permute.xlu0 %2099
      %2101 = vrot.lane.b32.xlu0 %v1907, 127
      %v2102 = vpop.permute.xlu0 %2101
      %2103 = vrot.lane.b32.xlu0 %v1908, 127
      %v2104 = vpop.permute.xlu0 %2103
      %2105 = vrot.lane.b32.xlu0 %v1909, 127
      %v2106 = vpop.permute.xlu0 %2105
      %2107 = vrot.lane.b32.xlu0 %v1910, 127
      %v2108 = vpop.permute.xlu0 %2107
      %2109 = vrot.lane.b32.xlu0 %v1911, 127
      %v2110 = vpop.permute.xlu0 %2109
      %v2122 = vsel %vm1942, %v2066, 0
      %v2125 = vsel %vm1942, %v2067, 0
      %v2128 = vsel %vm1942, %v2068, 0
      %v2131 = vsel %vm1942, %v2069, 0
      %v2134 = vsel %vm1942, %v2070, 0
      %v2137 = vsel %vm1942, %v2071, 0
      %v2140 = vsel %vm1942, %v2072, 0
      %v2143 = vsel %vm1942, %v2073, 0
      %v2146 = vsel %vm1942, %v2074, 0
      %v2149 = vsel %vm1942, %v2075, 0
      %v2152 = vsel %vm1942, %v2076, 0
      %v2155 = vsel %vm1942, %v2077, 0
      %v2158 = vsel %vm1942, %v2078, 0
      %v2161 = vsel %vm1942, %v2079, 0
      %v2164 = vsel %vm1942, %v2080, 0
      %2166 = vmatpush.msra.mxu0 0.0
      %2167 = vmatpush.msra.mxu0 0.0
      %2168 = vmatpush.msra.mxu0 0.0
      %2169 = vmatpush.msra.mxu0 0.0
      %2170 = vmatpush.msra.mxu0 0.0
      %2171 = vmatpush.msra.mxu0 0.0
      %2172 = vmatpush.msra.mxu0 %v2110
      %2173 = vmatpush.msra.mxu0 %v2108
      %2174 = vmatpush.msra.mxu0 %v2106
      %2175 = vmatpush.msra.mxu0 %v2104
      %2176 = vmatpush.msra.mxu0 %v2102
      %2177 = vmatpush.msra.mxu0 %v2100
      %2178 = vmatpush.msra.mxu0 %v2098
      %2179 = vmatpush.msra.mxu0 %v2096
      %2180 = vmatpush.msra.mxu0 %v2094
      %2181 = vmatpush.msra.mxu0 %v2092
      %2182 = vmatmul.f32.gmra.mxu0 %v2122
      %v2183 = vpop.f32.mrf.mxu0
      %v2184 = vadd.f32 0.0, %v2183
      %2185 = vmatmul.f32.gmra.mxu0 %v2125
      %v2186 = vpop.f32.mrf.mxu0
      %v2187 = vadd.f32 0.0, %v2186
      %2188 = vmatmul.f32.gmra.mxu0 %v2128
      %v2189 = vpop.f32.mrf.mxu0
      %v2190 = vadd.f32 0.0, %v2189
      %2191 = vmatmul.f32.gmra.mxu0 %v2131
      %v2192 = vpop.f32.mrf.mxu0
      %v2193 = vadd.f32 0.0, %v2192
      %2194 = vmatmul.f32.gmra.mxu0 %v2134
      %v2195 = vpop.f32.mrf.mxu0
      %v2196 = vadd.f32 0.0, %v2195
      %2197 = vmatmul.f32.gmra.mxu0 %v2137
      %v2198 = vpop.f32.mrf.mxu0
      %v2199 = vadd.f32 0.0, %v2198
      %2200 = vmatmul.f32.gmra.mxu0 %v2140
      %v2201 = vpop.f32.mrf.mxu0
      %v2202 = vadd.f32 0.0, %v2201
      %2203 = vmatmul.f32.gmra.mxu0 %v2143
      %v2204 = vpop.f32.mrf.mxu0
      %v2205 = vadd.f32 0.0, %v2204
      %2206 = vmatmul.f32.gmra.mxu0 %v2146
      %v2207 = vpop.f32.mrf.mxu0
      %v2208 = vadd.f32 0.0, %v2207
      %2209 = vmatmul.f32.gmra.mxu0 %v2149
      %v2210 = vpop.f32.mrf.mxu0
      %v2211 = vadd.f32 0.0, %v2210
      %2212 = vmatmul.f32.gmra.mxu0 %v2152
      %v2213 = vpop.f32.mrf.mxu0
      %v2214 = vadd.f32 0.0, %v2213
      %2215 = vmatmul.f32.gmra.mxu0 %v2155
      %v2216 = vpop.f32.mrf.mxu0
      %v2217 = vadd.f32 0.0, %v2216
      %2218 = vmatmul.f32.gmra.mxu0 %v2158
      %v2219 = vpop.f32.mrf.mxu0
      %v2220 = vadd.f32 0.0, %v2219
      %2221 = vmatmul.f32.gmra.mxu0 %v2161
      %v2222 = vpop.f32.mrf.mxu0
      %v2223 = vadd.f32 0.0, %v2222
      %2224 = vmatmul.f32.gmra.mxu0 %v2164
      %v2225 = vpop.f32.mrf.mxu0
      %v2226 = vadd.f32 0.0, %v2225
      %2227 = vdwg.mxu0
      %v2228 = vadd.f32 %v2050, %v2184
      %v2229 = vadd.f32 %v2051, %v2187
      %v2230 = vadd.f32 %v2052, %v2190
      %v2231 = vadd.f32 %v2053, %v2193
      %v2232 = vadd.f32 %v2054, %v2196
      %v2233 = vadd.f32 %v2055, %v2199
      %v2234 = vadd.f32 %v2056, %v2202
      %v2235 = vadd.f32 %v2057, %v2205
      %v2236 = vadd.f32 %v2058, %v2208
      %v2237 = vadd.f32 %v2059, %v2211
      %v2238 = vadd.f32 %v2060, %v2214
      %v2239 = vadd.f32 %v2061, %v2217
      %v2240 = vadd.f32 %v2062, %v2220
      %v2241 = vadd.f32 %v2063, %v2223
      %v2242 = vadd.f32 %v2064, %v2226
      %s2243 = scalar_lea.vmem %s5, 240
      %v2244 = vld [vmem:[%s2243] sm:$0xff]
      %v2245 = vld [vmem:[%s2243 + $0x8] sm:$0xff]
      %v2246 = vld [vmem:[%s2243 + $0x10] sm:$0xff]
      %v2247 = vld [vmem:[%s2243 + $0x18] sm:$0xff]
      %v2248 = vld [vmem:[%s2243 + $0x20] sm:$0xff]
      %v2249 = vld [vmem:[%s2243 + $0x28] sm:$0xff]
      %v2250 = vld [vmem:[%s2243 + $0x30] sm:$0xff]
      %v2251 = vld [vmem:[%s2243 + $0x38] sm:$0xff]
      %v2252 = vld [vmem:[%s2243 + $0x40] sm:$0xff]
      %v2253 = vld [vmem:[%s2243 + $0x48] sm:$0xff]
      %v2254 = vld [vmem:[%s2243 + $0x50] sm:$0xff]
      %v2255 = vld [vmem:[%s2243 + $0x58] sm:$0xff]
      %v2256 = vld [vmem:[%s2243 + $0x60] sm:$0xff]
      %v2257 = vld [vmem:[%s2243 + $0x68] sm:$0xff]
      %v2258 = vld [vmem:[%s2243 + $0x70] sm:$0xff]
      %2259 = vrot.lane.b32.xlu0 %v1902, 126
      %v2260 = vpop.permute.xlu0 %2259
      %2261 = vrot.lane.b32.xlu0 %v1903, 126
      %v2262 = vpop.permute.xlu0 %2261
      %2263 = vrot.lane.b32.xlu0 %v1904, 126
      %v2264 = vpop.permute.xlu0 %2263
      %2265 = vrot.lane.b32.xlu0 %v1905, 126
      %v2266 = vpop.permute.xlu0 %2265
      %2267 = vrot.lane.b32.xlu0 %v1906, 126
      %v2268 = vpop.permute.xlu0 %2267
      %2269 = vrot.lane.b32.xlu0 %v1907, 126
      %v2270 = vpop.permute.xlu0 %2269
      %2271 = vrot.lane.b32.xlu0 %v1908, 126
      %v2272 = vpop.permute.xlu0 %2271
      %2273 = vrot.lane.b32.xlu0 %v1909, 126
      %v2274 = vpop.permute.xlu0 %2273
      %2275 = vrot.lane.b32.xlu0 %v1910, 126
      %v2276 = vpop.permute.xlu0 %2275
      %2277 = vrot.lane.b32.xlu0 %v1911, 126
      %v2278 = vpop.permute.xlu0 %2277
      %v2290 = vsel %vm1942, %v2244, 0
      %v2293 = vsel %vm1942, %v2245, 0
      %v2296 = vsel %vm1942, %v2246, 0
      %v2299 = vsel %vm1942, %v2247, 0
      %v2302 = vsel %vm1942, %v2248, 0
      %v2305 = vsel %vm1942, %v2249, 0
      %v2308 = vsel %vm1942, %v2250, 0
      %v2311 = vsel %vm1942, %v2251, 0
      %v2314 = vsel %vm1942, %v2252, 0
      %v2317 = vsel %vm1942, %v2253, 0
      %v2320 = vsel %vm1942, %v2254, 0
      %v2323 = vsel %vm1942, %v2255, 0
      %v2326 = vsel %vm1942, %v2256, 0
      %v2329 = vsel %vm1942, %v2257, 0
      %v2332 = vsel %vm1942, %v2258, 0
      %2334 = vmatpush.msra.mxu0 0.0
      %2335 = vmatpush.msra.mxu0 0.0
      %2336 = vmatpush.msra.mxu0 0.0
      %2337 = vmatpush.msra.mxu0 0.0
      %2338 = vmatpush.msra.mxu0 0.0
      %2339 = vmatpush.msra.mxu0 0.0
      %2340 = vmatpush.msra.mxu0 %v2278
      %2341 = vmatpush.msra.mxu0 %v2276
      %2342 = vmatpush.msra.mxu0 %v2274
      %2343 = vmatpush.msra.mxu0 %v2272
      %2344 = vmatpush.msra.mxu0 %v2270
      %2345 = vmatpush.msra.mxu0 %v2268
      %2346 = vmatpush.msra.mxu0 %v2266
      %2347 = vmatpush.msra.mxu0 %v2264
      %2348 = vmatpush.msra.mxu0 %v2262
      %2349 = vmatpush.msra.mxu0 %v2260
      %2350 = vmatmul.f32.gmra.mxu0 %v2290
      %v2351 = vpop.f32.mrf.mxu0
      %v2352 = vadd.f32 0.0, %v2351
      %2353 = vmatmul.f32.gmra.mxu0 %v2293
      %v2354 = vpop.f32.mrf.mxu0
      %v2355 = vadd.f32 0.0, %v2354
      %2356 = vmatmul.f32.gmra.mxu0 %v2296
      %v2357 = vpop.f32.mrf.mxu0
      %v2358 = vadd.f32 0.0, %v2357
      %2359 = vmatmul.f32.gmra.mxu0 %v2299
      %v2360 = vpop.f32.mrf.mxu0
      %v2361 = vadd.f32 0.0, %v2360
      %2362 = vmatmul.f32.gmra.mxu0 %v2302
      %v2363 = vpop.f32.mrf.mxu0
      %v2364 = vadd.f32 0.0, %v2363
      %2365 = vmatmul.f32.gmra.mxu0 %v2305
      %v2366 = vpop.f32.mrf.mxu0
      %v2367 = vadd.f32 0.0, %v2366
      %2368 = vmatmul.f32.gmra.mxu0 %v2308
      %v2369 = vpop.f32.mrf.mxu0
      %v2370 = vadd.f32 0.0, %v2369
      %2371 = vmatmul.f32.gmra.mxu0 %v2311
      %v2372 = vpop.f32.mrf.mxu0
      %v2373 = vadd.f32 0.0, %v2372
      %2374 = vmatmul.f32.gmra.mxu0 %v2314
      %v2375 = vpop.f32.mrf.mxu0
      %v2376 = vadd.f32 0.0, %v2375
      %2377 = vmatmul.f32.gmra.mxu0 %v2317
      %v2378 = vpop.f32.mrf.mxu0
      %v2379 = vadd.f32 0.0, %v2378
      %2380 = vmatmul.f32.gmra.mxu0 %v2320
      %v2381 = vpop.f32.mrf.mxu0
      %v2382 = vadd.f32 0.0, %v2381
      %2383 = vmatmul.f32.gmra.mxu0 %v2323
      %v2384 = vpop.f32.mrf.mxu0
      %v2385 = vadd.f32 0.0, %v2384
      %2386 = vmatmul.f32.gmra.mxu0 %v2326
      %v2387 = vpop.f32.mrf.mxu0
      %v2388 = vadd.f32 0.0, %v2387
      %2389 = vmatmul.f32.gmra.mxu0 %v2329
      %v2390 = vpop.f32.mrf.mxu0
      %v2391 = vadd.f32 0.0, %v2390
      %2392 = vmatmul.f32.gmra.mxu0 %v2332
      %v2393 = vpop.f32.mrf.mxu0
      %v2394 = vadd.f32 0.0, %v2393
      %2395 = vdwg.mxu0
      %v2396 = vadd.f32 %v2228, %v2352
      %v2397 = vadd.f32 %v2229, %v2355
      %v2398 = vadd.f32 %v2230, %v2358
      %v2399 = vadd.f32 %v2231, %v2361
      %v2400 = vadd.f32 %v2232, %v2364
      %v2401 = vadd.f32 %v2233, %v2367
      %v2402 = vadd.f32 %v2234, %v2370
      %v2403 = vadd.f32 %v2235, %v2373
      %v2404 = vadd.f32 %v2236, %v2376
      %v2405 = vadd.f32 %v2237, %v2379
      %v2406 = vadd.f32 %v2238, %v2382
      %v2407 = vadd.f32 %v2239, %v2385
      %v2408 = vadd.f32 %v2240, %v2388
      %v2409 = vadd.f32 %v2241, %v2391
      %v2410 = vadd.f32 %v2242, %v2394
      %s2411 = scalar_lea.vmem %s5, 360
      %v2412 = vld [vmem:[%s2411] sm:$0xff]
      %v2413 = vld [vmem:[%s2411 + $0x8] sm:$0xff]
      %v2414 = vld [vmem:[%s2411 + $0x10] sm:$0xff]
      %v2415 = vld [vmem:[%s2411 + $0x18] sm:$0xff]
      %v2416 = vld [vmem:[%s2411 + $0x20] sm:$0xff]
      %v2417 = vld [vmem:[%s2411 + $0x28] sm:$0xff]
      %v2418 = vld [vmem:[%s2411 + $0x30] sm:$0xff]
      %v2419 = vld [vmem:[%s2411 + $0x38] sm:$0xff]
      %v2420 = vld [vmem:[%s2411 + $0x40] sm:$0xff]
      %v2421 = vld [vmem:[%s2411 + $0x48] sm:$0xff]
      %v2422 = vld [vmem:[%s2411 + $0x50] sm:$0xff]
      %v2423 = vld [vmem:[%s2411 + $0x58] sm:$0xff]
      %v2424 = vld [vmem:[%s2411 + $0x60] sm:$0xff]
      %v2425 = vld [vmem:[%s2411 + $0x68] sm:$0xff]
      %v2426 = vld [vmem:[%s2411 + $0x70] sm:$0xff]
      %2427 = vrot.lane.b32.xlu0 %v1902, 125
      %v2428 = vpop.permute.xlu0 %2427
      %2429 = vrot.lane.b32.xlu0 %v1903, 125
      %v2430 = vpop.permute.xlu0 %2429
      %2431 = vrot.lane.b32.xlu0 %v1904, 125
      %v2432 = vpop.permute.xlu0 %2431
      %2433 = vrot.lane.b32.xlu0 %v1905, 125
      %v2434 = vpop.permute.xlu0 %2433
      %2435 = vrot.lane.b32.xlu0 %v1906, 125
      %v2436 = vpop.permute.xlu0 %2435
      %2437 = vrot.lane.b32.xlu0 %v1907, 125
      %v2438 = vpop.permute.xlu0 %2437
      %2439 = vrot.lane.b32.xlu0 %v1908, 125
      %v2440 = vpop.permute.xlu0 %2439
      %2441 = vrot.lane.b32.xlu0 %v1909, 125
      %v2442 = vpop.permute.xlu0 %2441
      %2443 = vrot.lane.b32.xlu0 %v1910, 125
      %v2444 = vpop.permute.xlu0 %2443
      %2445 = vrot.lane.b32.xlu0 %v1911, 125
      %v2446 = vpop.permute.xlu0 %2445
      %v2458 = vsel %vm1942, %v2412, 0
      %v2461 = vsel %vm1942, %v2413, 0
      %v2464 = vsel %vm1942, %v2414, 0
      %v2467 = vsel %vm1942, %v2415, 0
      %v2470 = vsel %vm1942, %v2416, 0
      %v2473 = vsel %vm1942, %v2417, 0
      %v2476 = vsel %vm1942, %v2418, 0
      %v2479 = vsel %vm1942, %v2419, 0
      %v2482 = vsel %vm1942, %v2420, 0
      %v2485 = vsel %vm1942, %v2421, 0
      %v2488 = vsel %vm1942, %v2422, 0
      %v2491 = vsel %vm1942, %v2423, 0
      %v2494 = vsel %vm1942, %v2424, 0
      %v2497 = vsel %vm1942, %v2425, 0
      %v2500 = vsel %vm1942, %v2426, 0
      %2502 = vmatpush.msra.mxu0 0.0
      %2503 = vmatpush.msra.mxu0 0.0
      %2504 = vmatpush.msra.mxu0 0.0
      %2505 = vmatpush.msra.mxu0 0.0
      %2506 = vmatpush.msra.mxu0 0.0
      %2507 = vmatpush.msra.mxu0 0.0
      %2508 = vmatpush.msra.mxu0 %v2446
      %2509 = vmatpush.msra.mxu0 %v2444
      %2510 = vmatpush.msra.mxu0 %v2442
      %2511 = vmatpush.msra.mxu0 %v2440
      %2512 = vmatpush.msra.mxu0 %v2438
      %2513 = vmatpush.msra.mxu0 %v2436
      %2514 = vmatpush.msra.mxu0 %v2434
      %2515 = vmatpush.msra.mxu0 %v2432
      %2516 = vmatpush.msra.mxu0 %v2430
      %2517 = vmatpush.msra.mxu0 %v2428
      %2518 = vmatmul.f32.gmra.mxu0 %v2458
      %v2519 = vpop.f32.mrf.mxu0
      %v2520 = vadd.f32 0.0, %v2519
      %2521 = vmatmul.f32.gmra.mxu0 %v2461
      %v2522 = vpop.f32.mrf.mxu0
      %v2523 = vadd.f32 0.0, %v2522
      %2524 = vmatmul.f32.gmra.mxu0 %v2464
      %v2525 = vpop.f32.mrf.mxu0
      %v2526 = vadd.f32 0.0, %v2525
      %2527 = vmatmul.f32.gmra.mxu0 %v2467
      %v2528 = vpop.f32.mrf.mxu0
      %v2529 = vadd.f32 0.0, %v2528
      %2530 = vmatmul.f32.gmra.mxu0 %v2470
      %v2531 = vpop.f32.mrf.mxu0
      %v2532 = vadd.f32 0.0, %v2531
      %2533 = vmatmul.f32.gmra.mxu0 %v2473
      %v2534 = vpop.f32.mrf.mxu0
      %v2535 = vadd.f32 0.0, %v2534
      %2536 = vmatmul.f32.gmra.mxu0 %v2476
      %v2537 = vpop.f32.mrf.mxu0
      %v2538 = vadd.f32 0.0, %v2537
      %2539 = vmatmul.f32.gmra.mxu0 %v2479
      %v2540 = vpop.f32.mrf.mxu0
      %v2541 = vadd.f32 0.0, %v2540
      %2542 = vmatmul.f32.gmra.mxu0 %v2482
      %v2543 = vpop.f32.mrf.mxu0
      %v2544 = vadd.f32 0.0, %v2543
      %2545 = vmatmul.f32.gmra.mxu0 %v2485
      %v2546 = vpop.f32.mrf.mxu0
      %v2547 = vadd.f32 0.0, %v2546
      %2548 = vmatmul.f32.gmra.mxu0 %v2488
      %v2549 = vpop.f32.mrf.mxu0
      %v2550 = vadd.f32 0.0, %v2549
      %2551 = vmatmul.f32.gmra.mxu0 %v2491
      %v2552 = vpop.f32.mrf.mxu0
      %v2553 = vadd.f32 0.0, %v2552
      %2554 = vmatmul.f32.gmra.mxu0 %v2494
      %v2555 = vpop.f32.mrf.mxu0
      %v2556 = vadd.f32 0.0, %v2555
      %2557 = vmatmul.f32.gmra.mxu0 %v2497
      %v2558 = vpop.f32.mrf.mxu0
      %v2559 = vadd.f32 0.0, %v2558
      %2560 = vmatmul.f32.gmra.mxu0 %v2500
      %v2561 = vpop.f32.mrf.mxu0
      %v2562 = vadd.f32 0.0, %v2561
      %2563 = vdwg.mxu0
      %v2564 = vadd.f32 %v2396, %v2520
      %v2565 = vadd.f32 %v2397, %v2523
      %v2566 = vadd.f32 %v2398, %v2526
      %v2567 = vadd.f32 %v2399, %v2529
      %v2568 = vadd.f32 %v2400, %v2532
      %v2569 = vadd.f32 %v2401, %v2535
      %v2570 = vadd.f32 %v2402, %v2538
      %v2571 = vadd.f32 %v2403, %v2541
      %v2572 = vadd.f32 %v2404, %v2544
      %v2573 = vadd.f32 %v2405, %v2547
      %v2574 = vadd.f32 %v2406, %v2550
      %v2575 = vadd.f32 %v2407, %v2553
      %v2576 = vadd.f32 %v2408, %v2556
      %v2577 = vadd.f32 %v2409, %v2559
      %v2578 = vadd.f32 %v2410, %v2562
      %s2579 = scalar_lea.vmem %s5, 480
      %v2580 = vld [vmem:[%s2579] sm:$0xff]
      %v2581 = vld [vmem:[%s2579 + $0x8] sm:$0xff]
      %v2582 = vld [vmem:[%s2579 + $0x10] sm:$0xff]
      %v2583 = vld [vmem:[%s2579 + $0x18] sm:$0xff]
      %v2584 = vld [vmem:[%s2579 + $0x20] sm:$0xff]
      %v2585 = vld [vmem:[%s2579 + $0x28] sm:$0xff]
      %v2586 = vld [vmem:[%s2579 + $0x30] sm:$0xff]
      %v2587 = vld [vmem:[%s2579 + $0x38] sm:$0xff]
      %v2588 = vld [vmem:[%s2579 + $0x40] sm:$0xff]
      %v2589 = vld [vmem:[%s2579 + $0x48] sm:$0xff]
      %v2590 = vld [vmem:[%s2579 + $0x50] sm:$0xff]
      %v2591 = vld [vmem:[%s2579 + $0x58] sm:$0xff]
      %v2592 = vld [vmem:[%s2579 + $0x60] sm:$0xff]
      %v2593 = vld [vmem:[%s2579 + $0x68] sm:$0xff]
      %v2594 = vld [vmem:[%s2579 + $0x70] sm:$0xff]
      %2595 = vrot.lane.b32.xlu0 %v1902, 124
      %v2596 = vpop.permute.xlu0 %2595
      %2597 = vrot.lane.b32.xlu0 %v1903, 124
      %v2598 = vpop.permute.xlu0 %2597
      %2599 = vrot.lane.b32.xlu0 %v1904, 124
      %v2600 = vpop.permute.xlu0 %2599
      %2601 = vrot.lane.b32.xlu0 %v1905, 124
      %v2602 = vpop.permute.xlu0 %2601
      %2603 = vrot.lane.b32.xlu0 %v1906, 124
      %v2604 = vpop.permute.xlu0 %2603
      %2605 = vrot.lane.b32.xlu0 %v1907, 124
      %v2606 = vpop.permute.xlu0 %2605
      %2607 = vrot.lane.b32.xlu0 %v1908, 124
      %v2608 = vpop.permute.xlu0 %2607
      %2609 = vrot.lane.b32.xlu0 %v1909, 124
      %v2610 = vpop.permute.xlu0 %2609
      %2611 = vrot.lane.b32.xlu0 %v1910, 124
      %v2612 = vpop.permute.xlu0 %2611
      %2613 = vrot.lane.b32.xlu0 %v1911, 124
      %v2614 = vpop.permute.xlu0 %2613
      %v2626 = vsel %vm1942, %v2580, 0
      %v2629 = vsel %vm1942, %v2581, 0
      %v2632 = vsel %vm1942, %v2582, 0
      %v2635 = vsel %vm1942, %v2583, 0
      %v2638 = vsel %vm1942, %v2584, 0
      %v2641 = vsel %vm1942, %v2585, 0
      %v2644 = vsel %vm1942, %v2586, 0
      %v2647 = vsel %vm1942, %v2587, 0
      %v2650 = vsel %vm1942, %v2588, 0
      %v2653 = vsel %vm1942, %v2589, 0
      %v2656 = vsel %vm1942, %v2590, 0
      %v2659 = vsel %vm1942, %v2591, 0
      %v2662 = vsel %vm1942, %v2592, 0
      %v2665 = vsel %vm1942, %v2593, 0
      %v2668 = vsel %vm1942, %v2594, 0
      %2670 = vmatpush.msra.mxu0 0.0
      %2671 = vmatpush.msra.mxu0 0.0
      %2672 = vmatpush.msra.mxu0 0.0
      %2673 = vmatpush.msra.mxu0 0.0
      %2674 = vmatpush.msra.mxu0 0.0
      %2675 = vmatpush.msra.mxu0 0.0
      %2676 = vmatpush.msra.mxu0 %v2614
      %2677 = vmatpush.msra.mxu0 %v2612
      %2678 = vmatpush.msra.mxu0 %v2610
      %2679 = vmatpush.msra.mxu0 %v2608
      %2680 = vmatpush.msra.mxu0 %v2606
      %2681 = vmatpush.msra.mxu0 %v2604
      %2682 = vmatpush.msra.mxu0 %v2602
      %2683 = vmatpush.msra.mxu0 %v2600
      %2684 = vmatpush.msra.mxu0 %v2598
      %2685 = vmatpush.msra.mxu0 %v2596
      %2686 = vmatmul.f32.gmra.mxu0 %v2626
      %v2687 = vpop.f32.mrf.mxu0
      %v2688 = vadd.f32 0.0, %v2687
      %2689 = vmatmul.f32.gmra.mxu0 %v2629
      %v2690 = vpop.f32.mrf.mxu0
      %v2691 = vadd.f32 0.0, %v2690
      %2692 = vmatmul.f32.gmra.mxu0 %v2632
      %v2693 = vpop.f32.mrf.mxu0
      %v2694 = vadd.f32 0.0, %v2693
      %2695 = vmatmul.f32.gmra.mxu0 %v2635
      %v2696 = vpop.f32.mrf.mxu0
      %v2697 = vadd.f32 0.0, %v2696
      %2698 = vmatmul.f32.gmra.mxu0 %v2638
      %v2699 = vpop.f32.mrf.mxu0
      %v2700 = vadd.f32 0.0, %v2699
      %2701 = vmatmul.f32.gmra.mxu0 %v2641
      %v2702 = vpop.f32.mrf.mxu0
      %v2703 = vadd.f32 0.0, %v2702
      %2704 = vmatmul.f32.gmra.mxu0 %v2644
      %v2705 = vpop.f32.mrf.mxu0
      %v2706 = vadd.f32 0.0, %v2705
      %2707 = vmatmul.f32.gmra.mxu0 %v2647
      %v2708 = vpop.f32.mrf.mxu0
      %v2709 = vadd.f32 0.0, %v2708
      %2710 = vmatmul.f32.gmra.mxu0 %v2650
      %v2711 = vpop.f32.mrf.mxu0
      %v2712 = vadd.f32 0.0, %v2711
      %2713 = vmatmul.f32.gmra.mxu0 %v2653
      %v2714 = vpop.f32.mrf.mxu0
      %v2715 = vadd.f32 0.0, %v2714
      %2716 = vmatmul.f32.gmra.mxu0 %v2656
      %v2717 = vpop.f32.mrf.mxu0
      %v2718 = vadd.f32 0.0, %v2717
      %2719 = vmatmul.f32.gmra.mxu0 %v2659
      %v2720 = vpop.f32.mrf.mxu0
      %v2721 = vadd.f32 0.0, %v2720
      %2722 = vmatmul.f32.gmra.mxu0 %v2662
      %v2723 = vpop.f32.mrf.mxu0
      %v2724 = vadd.f32 0.0, %v2723
      %2725 = vmatmul.f32.gmra.mxu0 %v2665
      %v2726 = vpop.f32.mrf.mxu0
      %v2727 = vadd.f32 0.0, %v2726
      %2728 = vmatmul.f32.gmra.mxu0 %v2668
      %v2729 = vpop.f32.mrf.mxu0
      %v2730 = vadd.f32 0.0, %v2729
      %2731 = vdwg.mxu0
      %v2732 = vadd.f32 %v2564, %v2688
      %v2733 = vadd.f32 %v2565, %v2691
      %v2734 = vadd.f32 %v2566, %v2694
      %v2735 = vadd.f32 %v2567, %v2697
      %v2736 = vadd.f32 %v2568, %v2700
      %v2737 = vadd.f32 %v2569, %v2703
      %v2738 = vadd.f32 %v2570, %v2706
      %v2739 = vadd.f32 %v2571, %v2709
      %v2740 = vadd.f32 %v2572, %v2712
      %v2741 = vadd.f32 %v2573, %v2715
      %v2742 = vadd.f32 %v2574, %v2718
      %v2743 = vadd.f32 %v2575, %v2721
      %v2744 = vadd.f32 %v2576, %v2724
      %v2745 = vadd.f32 %v2577, %v2727
      %v2746 = vadd.f32 %v2578, %v2730
      %v2747 = vld [vmem:[%s7] sm:$0xff]
      %v2748 = vld [vmem:[%s7 + $0x8] sm:$0xff]
      %v2749 = vld [vmem:[%s7 + $0x10] sm:$0xff]
      %v2750 = vld [vmem:[%s7 + $0x18] sm:$0xff]
      %v2751 = vld [vmem:[%s7 + $0x20] sm:$0xff]
      %v2752 = vld [vmem:[%s7 + $0x28] sm:$0xff]
      %v2753 = vld [vmem:[%s7 + $0x30] sm:$0xff]
      %v2754 = vld [vmem:[%s7 + $0x38] sm:$0xff]
      %v2755 = vld [vmem:[%s7 + $0x40] sm:$0xff]
      %v2756 = vld [vmem:[%s7 + $0x48] sm:$0xff]
      %v2757 = vld [vmem:[%s7 + $0x50] sm:$0xf]
      %v2758 = vld [vmem:[%s8] sm:$0xff]
      %v2759 = vld [vmem:[%s8 + $0x8] sm:$0xff]
      %v2760 = vld [vmem:[%s8 + $0x10] sm:$0xff]
      %v2761 = vld [vmem:[%s8 + $0x18] sm:$0xff]
      %v2762 = vld [vmem:[%s8 + $0x20] sm:$0xff]
      %v2763 = vld [vmem:[%s8 + $0x28] sm:$0xff]
      %v2764 = vld [vmem:[%s8 + $0x30] sm:$0xff]
      %v2765 = vld [vmem:[%s8 + $0x38] sm:$0xff]
      %v2766 = vld [vmem:[%s8 + $0x40] sm:$0xff]
      %v2767 = vld [vmem:[%s8 + $0x48] sm:$0xff]
      %v2768 = vld [vmem:[%s8 + $0x50] sm:$0xf]
      %vm2769 = vcmask 982016
      %v2771 = vsel %vm2769, %v2747, 0
      %v2774 = vsel %vm2769, %v2748, 0
      %v2777 = vsel %vm2769, %v2749, 0
      %v2780 = vsel %vm2769, %v2750, 0
      %v2783 = vsel %vm2769, %v2751, 0
      %v2786 = vsel %vm2769, %v2752, 0
      %v2789 = vsel %vm2769, %v2753, 0
      %v2792 = vsel %vm2769, %v2754, 0
      %v2795 = vsel %vm2769, %v2755, 0
      %v2798 = vsel %vm2769, %v2756, 0
      %v2801 = vsel %vm2769, %v2757, 0
      %2803 = vmatpush.msra.mxu0 0.0
      %2804 = vmatpush.msra.mxu0 %v2746
      %2805 = vmatpush.msra.mxu0 %v2745
      %2806 = vmatpush.msra.mxu0 %v2744
      %2807 = vmatpush.msra.mxu0 %v2743
      %2808 = vmatpush.msra.mxu0 %v2742
      %2809 = vmatpush.msra.mxu0 %v2741
      %2810 = vmatpush.msra.mxu0 %v2740
      %2811 = vmatpush.msra.mxu0 %v2739
      %2812 = vmatpush.msra.mxu0 %v2738
      %2813 = vmatpush.msra.mxu0 %v2737
      %2814 = vmatpush.msra.mxu0 %v2736
      %2815 = vmatpush.msra.mxu0 %v2735
      %2816 = vmatpush.msra.mxu0 %v2734
      %2817 = vmatpush.msra.mxu0 %v2733
      %2818 = vmatpush.msra.mxu0 %v2732
      %2819 = vmatmul.f32.gmra.mxu0 %v2771
      %v2820 = vpop.f32.mrf.mxu0
      %v2821 = vadd.f32 %v2758, %v2820
      %2822 = vmatmul.f32.gmra.mxu0 %v2774
      %v2823 = vpop.f32.mrf.mxu0
      %v2824 = vadd.f32 %v2759, %v2823
      %2825 = vmatmul.f32.gmra.mxu0 %v2777
      %v2826 = vpop.f32.mrf.mxu0
      %v2827 = vadd.f32 %v2760, %v2826
      %2828 = vmatmul.f32.gmra.mxu0 %v2780
      %v2829 = vpop.f32.mrf.mxu0
      %v2830 = vadd.f32 %v2761, %v2829
      %2831 = vmatmul.f32.gmra.mxu0 %v2783
      %v2832 = vpop.f32.mrf.mxu0
      %v2833 = vadd.f32 %v2762, %v2832
      %2834 = vmatmul.f32.gmra.mxu0 %v2786
      %v2835 = vpop.f32.mrf.mxu0
      %v2836 = vadd.f32 %v2763, %v2835
      %2837 = vmatmul.f32.gmra.mxu0 %v2789
      %v2838 = vpop.f32.mrf.mxu0
      %v2839 = vadd.f32 %v2764, %v2838
      %2840 = vmatmul.f32.gmra.mxu0 %v2792
      %v2841 = vpop.f32.mrf.mxu0
      %v2842 = vadd.f32 %v2765, %v2841
      %2843 = vmatmul.f32.gmra.mxu0 %v2795
      %v2844 = vpop.f32.mrf.mxu0
      %v2845 = vadd.f32 %v2766, %v2844
      %2846 = vmatmul.f32.gmra.mxu0 %v2798
      %v2847 = vpop.f32.mrf.mxu0
      %v2848 = vadd.f32 %v2767, %v2847
      %2849 = vmatmul.f32.gmra.mxu0 %v2801
      %v2850 = vpop.f32.mrf.mxu0
      %v2851 = vadd.f32 %v2768, %v2850
      %2852 = vdwg.mxu0
      %v2853 = vld [vmem:[%s9] sm:$0xff]
      %v2854 = vld [vmem:[%s9 + $0x8] sm:$0x3]
      %v2855 = vld [vmem:[%s10] sm:$0xff]
      %v2856 = vld [vmem:[%s10 + $0x8] sm:$0x3]
      %v2858 = vsel %vm1205, %v2853, 0
      %v2861 = vsel %vm1205, %v2854, 0
      %v2864 = vsel %vm1076, %v2851, 0
      %2866 = vmatpush.msra.mxu0 0.0
      %2867 = vmatpush.msra.mxu0 0.0
      %2868 = vmatpush.msra.mxu0 0.0
      %2869 = vmatpush.msra.mxu0 0.0
      %2870 = vmatpush.msra.mxu0 0.0
      %2871 = vmatpush.msra.mxu0 %v2864
      %2872 = vmatpush.msra.mxu0 %v2848
      %2873 = vmatpush.msra.mxu0 %v2845
      %2874 = vmatpush.msra.mxu0 %v2842
      %2875 = vmatpush.msra.mxu0 %v2839
      %2876 = vmatpush.msra.mxu0 %v2836
      %2877 = vmatpush.msra.mxu0 %v2833
      %2878 = vmatpush.msra.mxu0 %v2830
      %2879 = vmatpush.msra.mxu0 %v2827
      %2880 = vmatpush.msra.mxu0 %v2824
      %2881 = vmatpush.msra.mxu0 %v2821
      %2882 = vmatmul.f32.gmra.mxu0 %v2858
      %v2883 = vpop.f32.mrf.mxu0
      %v2884 = vadd.f32 %v2855, %v2883
      %2885 = vmatmul.f32.gmra.mxu0 %v2861
      %v2886 = vpop.f32.mrf.mxu0
      %v2887 = vadd.f32 %v2856, %v2886
      %2888 = vdwg.mxu0
      %vm2889 = vcmask 7168
      %2890 = vst.msk [vmem:[%s386] sm:$0xff] %vm2889, %v2884
      %vm2891 = vcmask 1024
      %2892 = vst.msk [vmem:[%s386 + $0x8] sm:$0x3] %vm2891, %v2887
      %p2893 = scmp.lt.s32.totalorder %s22, 1
      %s2894 = scalar_select %p2893, %s22, 1
      %s2895 = smul.addr %s2894, 2
      %s2896 = smul.addr %s2895, 8
      %s2897 = scalar_lea.vmem %s11, %s2896
      // Predicated region
      $region65: #{lenet5_forward.1} parent=63 // pred_check
        %p2898 = pneg %p276
      $region66: #{lenet5_forward.1} parent=63 // pred_check_branch
        %2900 = sbr.rel (%p2898) target = $region68
      $region67: #{lenet5_forward.1} parent=63 // pred_region
        _
      $region68: #{lenet5_forward.1} parent=63 // pred_fallthru
        _
    $region64: #{lenet5_forward.1} parent=5 // pred_fallthru
      _
    %p2901 = scmp.le.s32.totalorder 2, %s17
    // Predicated region
    $region69: #{lenet5_forward.1} parent=5 // pred_check
      %p2902 = pneg %p2901
    $region70: #{lenet5_forward.1} parent=5 // pred_check_branch
      %2904 = sbr.rel (%p2902) target = $region72
    $region71: #{lenet5_forward.1} parent=5 // pred_region
      %s2905 = ssub.s32 %s17, 2
      // Predicated region
      $region73: #{lenet5_forward.1} parent=71 // pred_check
        %p2906 = pneg %p282
      $region74: #{lenet5_forward.1} parent=71 // pred_check_branch
        %2908 = sbr.rel (%p2906) target = $region76
      $region75: #{lenet5_forward.1} parent=71 // pred_region
        %p2909 = scmp.lt.s32.totalorder %s23, 1
        %s2910 = scalar_select %p2909, %s23, 1
        %s2911 = smul.addr %s2910, 2
        %s2912 = smul.addr %s2911, 8
        %s2913 = scalar_lea.vmem %s11, %s2912
      $region76: #{lenet5_forward.1} parent=71 // pred_fallthru
        _
    $region72: #{lenet5_forward.1} parent=5 // pred_fallthru
      _
  $region6: #{lenet5_forward.1} parent=0 // loop_footer
    %s21 = sadd.s32 1, %s17
  $region7: #{lenet5_forward.1} parent=0 // loop_footer_branch
    %16 = sbr.rel target = $region3
  $region8: #{lenet5_forward.1} parent=0 // loop_exit
    _

</llo_original>
